<compile_context>
chip_gen: v6e
topology: v6e:2x2x1
jax: 0.10.0
libtpu: 0.0.40
codegen_flags: <defaults>
</compile_context>

<pallas_src>
import math
from functools import partial

import jax
import jax.numpy as jnp
from jax.experimental import pallas as pl
from jax.experimental.pallas import tpu as pltpu

NEG_MASK = -1e30  # finite "masked" value (avoids -inf - (-inf) = NaN)


# ----------------------------------------------------------------------------
# In-kernel helpers
# ----------------------------------------------------------------------------
def _layer_norm(x, gb, eps=1e-5):
    """LayerNorm over last dim. gb: (2, E), row 0 = gamma, row 1 = beta."""
    mu = jnp.mean(x, axis=-1, keepdims=True)
    var = jnp.mean((x - mu) ** 2, axis=-1, keepdims=True)
    return (x - mu) * jax.lax.rsqrt(var + eps) * gb[0:1] + gb[1:2]


# ----------------------------------------------------------------------------
# Fused encoder (num_en blocks) + prediction-head kernel
#   grid = (batch_blocks, num_en)   ("parallel", "arbitrary")
#   xemb lives in a (M, E) VMEM scratch across the layer axis.
# ----------------------------------------------------------------------------
def encoder_kernel(q_ref, x_ref, mask_ref,
                   wq_ref, wkv_ref, bq_ref, bkv_ref,
                   wo_ref, bo_ref, ln1_ref,
                   w1_ref, b1_ref, w2_ref, b2_ref, ln2_ref,
                   wp_ref, bp_ref,
                   o_ref, x_scr,
                   *, num_heads, head_dim, bblk, seq_len):
    layer = pl.program_id(1)
    H, Dh, L = num_heads, head_dim, seq_len
    E = H * Dh
    M = bblk * L

    # First layer of this batch block: bring xemb into the VMEM-resident state.
    @pl.when(layer == 0)
    def _():
        x_scr[...] = x_ref[...].reshape(M, E)

    q2 = q_ref[...].reshape(M, E)        # (M, E) f32 query stream (qshftemb)
    x2 = x_scr[...]                      # (M, E) f32 carried key/value stream
    qb = q2.astype(jnp.bfloat16)         # bf16 only at dot boundaries
    xb = x2.astype(jnp.bfloat16)

    # Fused projections: one dot for Q (N=E), one dot for K|V (N=2E).
    q_proj = jnp.dot(qb, wq_ref[0], preferred_element_type=jnp.float32) + bq_ref[0]
    kv_proj = jnp.dot(xb, wkv_ref[0], preferred_element_type=jnp.float32) + bkv_ref[0]

    def split_heads(t):
        # (M, E) -> (H*bblk, L, Dh); leading index = h*bblk + b (lane slices +
        # stack along a new leading axis; avoids 4-D transposes in Mosaic).
        return jnp.stack(
            [t[:, h * Dh:(h + 1) * Dh].reshape(bblk, L, Dh) for h in range(H)],
            axis=0).reshape(H * bblk, L, Dh)

    Qh = split_heads(q_proj).astype(jnp.bfloat16)          # (H*bblk, L, Dh)
    Kh = split_heads(kv_proj[:, :E]).astype(jnp.bfloat16)
    Vh = split_heads(kv_proj[:, E:]).astype(jnp.bfloat16)

    # Head-batched attention (single masked softmax for all heads/batches).
    s = jnp.einsum('bqd,bkd->bqk', Qh, Kh,
                   preferred_element_type=jnp.float32)      # (H*bblk, L, L)
    s = s + mask_ref[...][None, :, :]                       # implicit broadcast
    s = s - jnp.max(s, axis=-1, keepdims=True)
    e = jnp.exp(s)
    p = e * pl.reciprocal(jnp.sum(e, axis=-1, keepdims=True), approx=True)

    ctx = jnp.einsum('bqk,bkd->bqd', p.astype(jnp.bfloat16), Vh,
                     preferred_element_type=jnp.float32)    # (H*bblk, L, Dh)
    ctx = ctx.reshape(H, M, Dh)
    # Re-assemble a single (M, E) context slab -> ONE full output projection.
    attn_slab = jnp.concatenate([ctx[h] for h in range(H)], axis=-1)   # (M, E)
    attn_out = jnp.dot(attn_slab.astype(jnp.bfloat16), wo_ref[0],
                       preferred_element_type=jnp.float32) + bo_ref[0]

    # attn_dropout: identity (eval); residual w.r.t. the query stream.
    h1 = _layer_norm(q2 + attn_out, ln1_ref[0])

    f = jnp.maximum(jnp.dot(h1.astype(jnp.bfloat16), w1_ref[0],
                            preferred_element_type=jnp.float32) + b1_ref[0], 0.0)
    # FFN inner / outer dropout: identity (eval)
    f = jnp.dot(f.astype(jnp.bfloat16), w2_ref[0],
                preferred_element_type=jnp.float32) + b2_ref[0]
    x_new = _layer_norm(h1 + f, ln2_ref[0])                 # (M, E)

    x_scr[...] = x_new                                      # carry to next layer

    # Last layer: fused prediction head  p = sigmoid(x . w_pred^T + b_pred),
    # emitted lane-dense as a (1, 1, M) row.
    @pl.when(layer == pl.num_programs(1) - 1)
    def _():
        logits = jax.lax.dot_general(
            wp_ref[...], x_new,
            dimension_numbers=(((1,), (1,)), ((), ())),
            preferred_element_type=jnp.float32) + bp_ref[...]           # (1, M)
        o_ref[...] = (1.0 / (1.0 + jnp.exp(-logits))).reshape(1, 1, M).astype(o_ref.dtype)


def _pick_bblk(B, L, target_rows=256):
    """Largest divisor of B with bblk*L <= target_rows; keep >= 2 batch blocks
    when B > 1 so the 'parallel' grid axis can shard across v7x's 2 TCs."""
    divs = [d for d in range(1, B + 1) if B % d == 0]
    fitting = [d for d in divs if d * L <= target_rows] or [1]
    bblk = max(fitting)
    if bblk == B and B > 1:
        smaller = [d for d in fitting if d < B]
        if smaller:
            bblk = max(smaller)
    return bblk


def desakt_encode(qshftemb, xemb, add_mask, enc, w_pred, b_pred, *, num_heads, bblk=None):
    B, L, E = xemb.shape
    n_layers = enc["wq"].shape[0]
    if bblk is None:
        bblk = _pick_bblk(B, L)
    assert B % bblk == 0
    nb = B // bblk
    M = bblk * L

    batch_spec = pl.BlockSpec((bblk, L, E), lambda i, l: (i, 0, 0))

    def rep(arr):                        # replicated input, fetched once
        n = arr.ndim
        return pl.BlockSpec(arr.shape, lambda i, l, n=n: (0,) * n)

    def per_layer(arr):                  # stream one layer-slice per grid step
        shp = arr.shape
        n = arr.ndim
        return pl.BlockSpec((1,) + shp[1:], lambda i, l, n=n: (l,) + (0,) * (n - 1))

    kern = partial(encoder_kernel, num_heads=num_heads, head_dim=E // num_heads,
                   bblk=bblk, seq_len=L)

    # Rough VMEM budget (double-buffered inputs + per-layer weights + scratch
    # + temporaries), with 2x headroom; capped at 64 MiB so it stays v7x-safe.
    nbytes = lambda a: int(a.size) * a.dtype.itemsize
    layer_bytes = sum(nbytes(enc[k]) // n_layers for k in enc)
    block_bytes = M * E * 4
    est = (2 * 2 * block_bytes + 2 * layer_bytes + block_bytes
           + 8 * M * max(2 * E, L * num_heads) * 4)
    vmem_limit = int(min(max(2 * est, 32 << 20), 64 << 20))

    out = pl.pallas_call(
        kern,
        out_shape=jax.ShapeDtypeStruct((nb, 1, M), jnp.float32),
        grid=(nb, n_layers),
        in_specs=[batch_spec, batch_spec, rep(add_mask),
                  per_layer(enc["wq"]), per_layer(enc["wkv"]),
                  per_layer(enc["bq"]), per_layer(enc["bkv"]),
                  per_layer(enc["wo"]), per_layer(enc["bo"]), per_layer(enc["ln1"]),
                  per_layer(enc["w1"]), per_layer(enc["b1"]),
                  per_layer(enc["w2"]), per_layer(enc["b2"]), per_layer(enc["ln2"]),
                  rep(w_pred), rep(b_pred)],
        out_specs=pl.BlockSpec((1, 1, M), lambda i, l: (i, 0, 0)),
        scratch_shapes=[pltpu.VMEM((M, E), jnp.float32)],
        compiler_params=pltpu.CompilerParams(
            dimension_semantics=("parallel", "arbitrary"),
            vmem_limit_bytes=vmem_limit),
    )(qshftemb, xemb, add_mask,
      enc["wq"], enc["wkv"], enc["bq"], enc["bkv"],
      enc["wo"], enc["bo"], enc["ln1"],
      enc["w1"], enc["b1"], enc["w2"], enc["b2"], enc["ln2"],
      w_pred, b_pred)
    return out.reshape(B, L)


# ----------------------------------------------------------------------------
# Parameter init (deterministic, synthetic) + kernel-ready packing
# ----------------------------------------------------------------------------
def init_params(key, num_c, seq_len, emb_size, num_heads, num_en):
    E = emb_size

    def nrm(k, shape, scale=0.05):
        return (scale * jax.random.normal(k, shape)).astype(jnp.float32)

    ks = iter(jax.random.split(key, 8 + num_en * 16))
    params = {
        "num_c": num_c, "seq_len": seq_len, "num_heads": num_heads,
        "interaction_emb": nrm(next(ks), (num_c * 2, E), 1.0),
        "exercise_emb":    nrm(next(ks), (num_c, E), 1.0),
        "position_emb":    nrm(next(ks), (seq_len, E), 1.0),
        "init_alphas":     (0.001 * jax.random.normal(next(ks), (seq_len, 2))).astype(jnp.float32),
        "w_pred":          nrm(next(ks), (1, E)),
        "b_pred":          jnp.zeros((1, 1), jnp.float32),
    }
    ln_init = jnp.concatenate([jnp.ones((1, E)), jnp.zeros((1, E))], axis=0).astype(jnp.float32)
    blocks = []
    for _ in range(num_en):
        blocks.append({
            "wq": nrm(next(ks), (E, E)), "wk": nrm(next(ks), (E, E)),
            "wv": nrm(next(ks), (E, E)), "b_in": nrm(next(ks), (3, E)),
            "wo": nrm(next(ks), (E, E)), "bo": nrm(next(ks), (1, E)),
            "ln1": ln_init,
            "w1": nrm(next(ks), (E, E)), "b1": nrm(next(ks), (1, E)),
            "w2": nrm(next(ks), (E, E)), "b2": nrm(next(ks), (1, E)),
            "ln2": ln_init,
        })
    params["blocks"] = blocks
    return params


def pack_encoder_params(blocks, num_heads):
    """Stack per-layer weights, fuse K|V, fold 1/sqrt(Dh) into Wq/bq, cast to bf16."""
    n = len(blocks)
    E = blocks[0]["wq"].shape[0]
    Dh = E // num_heads
    scale = 1.0 / math.sqrt(Dh)

    def stack(name):
        return jnp.stack([b[name] for b in blocks], axis=0)

    wq = (stack("wq") * scale).astype(jnp.bfloat16)                     # (n, E, E)
    wkv = jnp.concatenate([stack("wk"), stack("wv")], axis=-1).astype(jnp.bfloat16)  # (n, E, 2E)

    b_in = stack("b_in")                                                # (n, 3, E)
    bq = (b_in[:, 0:1] * scale).astype(jnp.float32)                     # (n, 1, E)
    bkv = jnp.concatenate([b_in[:, 1:2], b_in[:, 2:3]], axis=-1).astype(jnp.float32)  # (n, 1, 2E)

    return {
        "wq": wq, "wkv": wkv, "bq": bq, "bkv": bkv,
        "wo": stack("wo").astype(jnp.bfloat16),   # (n, E, E)
        "bo": stack("bo").astype(jnp.float32),    # (n, 1, E)
        "ln1": stack("ln1").astype(jnp.float32),  # (n, 2, E)
        "w1": stack("w1").astype(jnp.bfloat16),
        "b1": stack("b1").astype(jnp.float32),
        "w2": stack("w2").astype(jnp.bfloat16),
        "b2": stack("b2").astype(jnp.float32),
        "ln2": stack("ln2").astype(jnp.float32),
    }


# ----------------------------------------------------------------------------
# Full desakt forward (emb_type == 'qid', qtest=False)
# ----------------------------------------------------------------------------
def desakt_forward(params, enc_packed, q_ids, r, qry, gumbel_key):
    num_c = params["num_c"]
    L = params["seq_len"]
    H = params["num_heads"]

    # --- base_emb (embedding gathers: plain-JAX glue) ---
    x = q_ids + num_c * r
    xemb = jnp.take(params["interaction_emb"], x, axis=0)          # (B, L, E)
    qshftemb = jnp.take(params["exercise_emb"], qry, axis=0)       # (B, L, E)
    xemb = xemb + params["position_emb"][:L][None, :, :]

    # --- generate_differentiable_attention_mask (hard Gumbel, tiny glue) ---
    # TODO(synk): forward value only; the straight-through gradient trick of the
    # PyTorch module is irrelevant for this inference kernel.
    eps = 1e-5
    expo = jax.random.exponential(gumbel_key, shape=params["init_alphas"].shape)
    gumbels = params["init_alphas"] - jnp.log(expo + eps)          # tau = 1
    y_soft = jax.nn.softmax(gumbels, axis=-1)
    y_hard = jax.nn.one_hot(jnp.argmax(y_soft, axis=-1), 2, dtype=jnp.float32)
    m = y_hard[:, 0]                                               # (L,), in {0, 1}
    idx = jnp.arange(L)
    dam2d = m[jnp.abs(idx[:, None] - idx[None, :])]                # dam[i,j] = m[|i-j|]
    causal_bad = idx[None, :] > idx[:, None]                       # mask future keys
    bad = causal_bad | (dam2d == 0)
    add_mask = jnp.where(bad, jnp.float32(NEG_MASK), jnp.float32(0.0))   # (L, L)

    # --- fused encoder blocks + prediction head (single Pallas kernel) ---
    p = desakt_encode(qshftemb, xemb, add_mask, enc_packed,
                      params["w_pred"], params["b_pred"], num_heads=H)

    mask_l1 = jnp.sum(jnp.abs(params["init_alphas"]))
    return p, mask_l1, (qshftemb, xemb, add_mask)


# ----------------------------------------------------------------------------
# Plain-JAX reference of the encoder+head (f32) for a loose numeric check
# ----------------------------------------------------------------------------
def _ln_ref(x, gb, eps=1e-5):
    mu = x.mean(-1, keepdims=True)
    var = ((x - mu) ** 2).mean(-1, keepdims=True)
    return (x - mu) / jnp.sqrt(var + eps) * gb[0] + gb[1]


def encode_ref(qshftemb, xemb, add_mask, blocks, w_pred, b_pred, num_heads):
    B, L, E = xemb.shape
    H = num_heads
    Dh = E // H
    scale = 1.0 / math.sqrt(Dh)
    x = xemb
    for blk in blocks:
        q = qshftemb
        Q = (q @ blk["wq"] + blk["b_in"][0]) * scale
        K = x @ blk["wk"] + blk["b_in"][1]
        V = x @ blk["wv"] + blk["b_in"][2]
        heads = lambda t: t.reshape(B, L, H, Dh).transpose(0, 2, 1, 3)
        Qh, Kh, Vh = heads(Q), heads(K), heads(V)
        s = jnp.einsum('bhqd,bhkd->bhqk', Qh, Kh) + add_mask[None, None]
        pr = jax.nn.softmax(s, axis=-1)
        ctx = jnp.einsum('bhqk,bhkd->bhqd', pr, Vh).transpose(0, 2, 1, 3).reshape(B, L, E)
        attn = ctx @ blk["wo"] + blk["bo"]
        h1 = _ln_ref(q + attn, blk["ln1"])
        f = jnp.maximum(h1 @ blk["w1"] + blk["b1"], 0.0)
        f = f @ blk["w2"] + blk["b2"]
        x = _ln_ref(h1 + f, blk["ln2"])
    logits = jnp.einsum('ble,e->bl', x, w_pred[0]) + b_pred[0, 0]
    return jax.nn.sigmoid(logits)


# ----------------------------------------------------------------------------
if __name__ == "__main__":
    num_c, seq_len, emb_size, num_heads, num_en = 50, 16, 64, 2, 2
    B = 2

    key = jax.random.PRNGKey(0)
    k_param, k_data, k_gumbel = jax.random.split(key, 3)
    params = init_params(k_param, num_c, seq_len, emb_size, num_heads, num_en)
    enc_packed = pack_encoder_params(params["blocks"], num_heads)

    kq, kr, kqry = jax.random.split(k_data, 3)
    q_ids = jax.random.randint(kq, (B, seq_len), 0, num_c)
    r = jax.random.randint(kr, (B, seq_len), 0, 2)
    qry = jax.random.randint(kqry, (B, seq_len), 0, num_c)

    p, mask_l1, (qshftemb, xemb, add_mask) = desakt_forward(
        params, enc_packed, q_ids, r, qry, k_gumbel)
    jax.block_until_ready((p, mask_l1))

    assert p.shape == (B, seq_len)
    assert mask_l1.shape == ()
    assert bool(jnp.all(jnp.isfinite(p)))

    # Loose numeric check vs. a plain-JAX f32 reference (bf16 dots + approx
    # reciprocal inside the kernel -> small deviations expected).
    p_ref = encode_ref(qshftemb, xemb, add_mask, params["blocks"],
                       params["w_pred"], params["b_pred"], num_heads)
    jax.block_until_ready(p_ref)
    assert float(jnp.max(jnp.abs(p - p_ref))) < 5e-2

    print("KERNEL_OK")
</pallas_src>

<mosaic_0001>
module attributes {stable_mosaic.version = 11 : i64} {
  func.func @encoder_kernel(%arg0: i32, %arg1: i32, %arg2: memref<1x16x64xf32, #tpu.memory_space<vmem>>, %arg3: memref<1x16x64xf32, #tpu.memory_space<vmem>>, %arg4: memref<16x16xf32, #tpu.memory_space<vmem>>, %arg5: memref<1x64x64xbf16, #tpu.memory_space<vmem>>, %arg6: memref<1x64x128xbf16, #tpu.memory_space<vmem>>, %arg7: memref<1x1x64xf32, #tpu.memory_space<vmem>>, %arg8: memref<1x1x128xf32, #tpu.memory_space<vmem>>, %arg9: memref<1x64x64xbf16, #tpu.memory_space<vmem>>, %arg10: memref<1x1x64xf32, #tpu.memory_space<vmem>>, %arg11: memref<1x2x64xf32, #tpu.memory_space<vmem>>, %arg12: memref<1x64x64xbf16, #tpu.memory_space<vmem>>, %arg13: memref<1x1x64xf32, #tpu.memory_space<vmem>>, %arg14: memref<1x64x64xbf16, #tpu.memory_space<vmem>>, %arg15: memref<1x1x64xf32, #tpu.memory_space<vmem>>, %arg16: memref<1x2x64xf32, #tpu.memory_space<vmem>>, %arg17: memref<1x64xf32, #tpu.memory_space<vmem>>, %arg18: memref<1x1xf32, #tpu.memory_space<vmem>>, %arg19: memref<1x1x16xf32, #tpu.memory_space<vmem>>, %arg20: memref<16x64xf32, #tpu.memory_space<vmem>>) attributes {dimension_semantics = [#tpu.dimension_semantics<parallel>, #tpu.dimension_semantics<arbitrary>], iteration_bounds = array<i64: 2, 2>, scalar_prefetch = 0 : i64, scratch_operands = 1 : i64, tpu.core_type = #tpu.core_type<tc>, window_params = [{transform_indices = @transform_0, window_bounds = array<i64: 1, 16, 64>}, {transform_indices = @transform_1, window_bounds = array<i64: 1, 16, 64>}, {pipeline_mode = #tpu.pipeline_mode<synchronous>, transform_indices = @transform_2, window_bounds = array<i64: 16, 16>}, {transform_indices = @transform_3, window_bounds = array<i64: 1, 64, 64>}, {transform_indices = @transform_4, window_bounds = array<i64: 1, 64, 128>}, {transform_indices = @transform_5, window_bounds = array<i64: 1, 1, 64>}, {transform_indices = @transform_6, window_bounds = array<i64: 1, 1, 128>}, {transform_indices = @transform_7, window_bounds = array<i64: 1, 64, 64>}, {transform_indices = @transform_8, window_bounds = array<i64: 1, 1, 64>}, {transform_indices = @transform_9, window_bounds = array<i64: 1, 2, 64>}, {transform_indices = @transform_10, window_bounds = array<i64: 1, 64, 64>}, {transform_indices = @transform_11, window_bounds = array<i64: 1, 1, 64>}, {transform_indices = @transform_12, window_bounds = array<i64: 1, 64, 64>}, {transform_indices = @transform_13, window_bounds = array<i64: 1, 1, 64>}, {transform_indices = @transform_14, window_bounds = array<i64: 1, 2, 64>}, {pipeline_mode = #tpu.pipeline_mode<synchronous>, transform_indices = @transform_15, window_bounds = array<i64: 1, 64>}, {pipeline_mode = #tpu.pipeline_mode<synchronous>, transform_indices = @transform_16, window_bounds = array<i64: 1, 1>}, {transform_indices = @transform_17, window_bounds = array<i64: 1, 1, 16>}]} {
    %c0_i32 = arith.constant 0 : i32
    %0 = arith.cmpi eq, %arg1, %c0_i32 : i32
    %1 = arith.extui %0 : i1 to i32
    %c0_i32_0 = arith.constant 0 : i32
    %2 = arith.cmpi ne, %1, %c0_i32_0 : i32
    scf.if %2 {
      %c0_65 = arith.constant 0 : index
      %c0_66 = arith.constant 0 : index
      %c0_67 = arith.constant 0 : index
      %157 = vector.load %arg3[%c0_65, %c0_66, %c0_67] : memref<1x16x64xf32, #tpu.memory_space<vmem>>, vector<1x16x64xf32>
      %158 = vector.shape_cast %157 : vector<1x16x64xf32> to vector<16x64xf32>
      %c0_68 = arith.constant 0 : index
      %c0_69 = arith.constant 0 : index
      %159 = vector.load %arg20[%c0_68, %c0_69] : memref<16x64xf32, #tpu.memory_space<vmem>>, vector<16x64xf32>
      tpu.vector_store %arg20[%c0_68, %c0_69], %158 {strides = array<i32>} : memref<16x64xf32, #tpu.memory_space<vmem>>, vector<16x64xf32>,
    } else {
    }
    %c0 = arith.constant 0 : index
    %c0_1 = arith.constant 0 : index
    %c0_2 = arith.constant 0 : index
    %3 = vector.load %arg2[%c0, %c0_1, %c0_2] : memref<1x16x64xf32, #tpu.memory_space<vmem>>, vector<1x16x64xf32>
    %4 = vector.shape_cast %3 : vector<1x16x64xf32> to vector<16x64xf32>
    %c0_3 = arith.constant 0 : index
    %c0_4 = arith.constant 0 : index
    %5 = vector.load %arg20[%c0_3, %c0_4] : memref<16x64xf32, #tpu.memory_space<vmem>>, vector<16x64xf32>
    %6 = arith.truncf %4 : vector<16x64xf32> to vector<16x64xbf16>
    %7 = arith.truncf %5 : vector<16x64xf32> to vector<16x64xbf16>
    %c0_5 = arith.constant 0 : index
    %c0_6 = arith.constant 0 : index
    %c0_7 = arith.constant 0 : index
    %8 = vector.load %arg5[%c0_5, %c0_6, %c0_7] : memref<1x64x64xbf16, #tpu.memory_space<vmem>>, vector<1x64x64xbf16>
    %9 = vector.shape_cast %8 : vector<1x64x64xbf16> to vector<64x64xbf16>
    %cst = arith.constant dense<0.000000e+00> : vector<16x64xf32>
    %10 = tpu.matmul %6, %9, %cst {dimension_numbers = #tpu.dot_dimension_numbers<[1], [0], [0], [1], [0, 0, 1, 1], [], []>} : vector<16x64xbf16>, vector<64x64xbf16>, vector<16x64xf32> -> vector<16x64xf32>
    %c0_8 = arith.constant 0 : index
    %c0_9 = arith.constant 0 : index
    %c0_10 = arith.constant 0 : index
    %11 = vector.load %arg7[%c0_8, %c0_9, %c0_10] : memref<1x1x64xf32, #tpu.memory_space<vmem>>, vector<1x1x64xf32>
    %12 = vector.shape_cast %11 : vector<1x1x64xf32> to vector<1x64xf32>
    %13 = vector.broadcast %12 : vector<1x64xf32> to vector<16x64xf32>
    %14 = arith.addf %10, %13 : vector<16x64xf32>
    %c0_11 = arith.constant 0 : index
    %c0_12 = arith.constant 0 : index
    %c0_13 = arith.constant 0 : index
    %15 = vector.load %arg6[%c0_11, %c0_12, %c0_13] : memref<1x64x128xbf16, #tpu.memory_space<vmem>>, vector<1x64x128xbf16>
    %16 = vector.shape_cast %15 : vector<1x64x128xbf16> to vector<64x128xbf16>
    %cst_14 = arith.constant dense<0.000000e+00> : vector<16x128xf32>
    %17 = tpu.matmul %7, %16, %cst_14 {dimension_numbers = #tpu.dot_dimension_numbers<[1], [0], [0], [1], [0, 0, 1, 1], [], []>} : vector<16x64xbf16>, vector<64x128xbf16>, vector<16x128xf32> -> vector<16x128xf32>
    %c0_15 = arith.constant 0 : index
    %c0_16 = arith.constant 0 : index
    %c0_17 = arith.constant 0 : index
    %18 = vector.load %arg8[%c0_15, %c0_16, %c0_17] : memref<1x1x128xf32, #tpu.memory_space<vmem>>, vector<1x1x128xf32>
    %19 = vector.shape_cast %18 : vector<1x1x128xf32> to vector<1x128xf32>
    %20 = vector.broadcast %19 : vector<1x128xf32> to vector<16x128xf32>
    %21 = arith.addf %17, %20 : vector<16x128xf32>
    %22 = vector.extract_strided_slice %14 {offsets = [0, 0], sizes = [16, 32], strides = [1, 1]} : vector<16x64xf32> to vector<16x32xf32>
    %23 = vector.shape_cast %22 : vector<16x32xf32> to vector<1x16x32xf32>
    %24 = vector.extract_strided_slice %14 {offsets = [0, 32], sizes = [16, 32], strides = [1, 1]} : vector<16x64xf32> to vector<16x32xf32>
    %25 = vector.shape_cast %24 : vector<16x32xf32> to vector<1x16x32xf32>
    %26 = vector.shape_cast %23 : vector<1x16x32xf32> to vector<1x1x16x32xf32>
    %27 = vector.shape_cast %25 : vector<1x16x32xf32> to vector<1x1x16x32xf32>
    %28 = tpu.concatenate %26, %27 in 0 : vector<1x1x16x32xf32>, vector<1x1x16x32xf32> -> vector<2x1x16x32xf32>
    %29 = vector.shape_cast %28 : vector<2x1x16x32xf32> to vector<2x16x32xf32>
    %30 = arith.truncf %29 : vector<2x16x32xf32> to vector<2x16x32xbf16>
    %31 = vector.extract_strided_slice %21 {offsets = [0, 0], sizes = [16, 64], strides = [1, 1]} : vector<16x128xf32> to vector<16x64xf32>
    %32 = vector.extract_strided_slice %31 {offsets = [0, 0], sizes = [16, 32], strides = [1, 1]} : vector<16x64xf32> to vector<16x32xf32>
    %33 = vector.shape_cast %32 : vector<16x32xf32> to vector<1x16x32xf32>
    %34 = vector.extract_strided_slice %31 {offsets = [0, 32], sizes = [16, 32], strides = [1, 1]} : vector<16x64xf32> to vector<16x32xf32>
    %35 = vector.shape_cast %34 : vector<16x32xf32> to vector<1x16x32xf32>
    %36 = vector.shape_cast %33 : vector<1x16x32xf32> to vector<1x1x16x32xf32>
    %37 = vector.shape_cast %35 : vector<1x16x32xf32> to vector<1x1x16x32xf32>
    %38 = tpu.concatenate %36, %37 in 0 : vector<1x1x16x32xf32>, vector<1x1x16x32xf32> -> vector<2x1x16x32xf32>
    %39 = vector.shape_cast %38 : vector<2x1x16x32xf32> to vector<2x16x32xf32>
    %40 = arith.truncf %39 : vector<2x16x32xf32> to vector<2x16x32xbf16>
    %41 = vector.extract_strided_slice %21 {offsets = [0, 64], sizes = [16, 64], strides = [1, 1]} : vector<16x128xf32> to vector<16x64xf32>
    %42 = vector.extract_strided_slice %41 {offsets = [0, 0], sizes = [16, 32], strides = [1, 1]} : vector<16x64xf32> to vector<16x32xf32>
    %43 = vector.shape_cast %42 : vector<16x32xf32> to vector<1x16x32xf32>
    %44 = vector.extract_strided_slice %41 {offsets = [0, 32], sizes = [16, 32], strides = [1, 1]} : vector<16x64xf32> to vector<16x32xf32>
    %45 = vector.shape_cast %44 : vector<16x32xf32> to vector<1x16x32xf32>
    %46 = vector.shape_cast %43 : vector<1x16x32xf32> to vector<1x1x16x32xf32>
    %47 = vector.shape_cast %45 : vector<1x16x32xf32> to vector<1x1x16x32xf32>
    %48 = tpu.concatenate %46, %47 in 0 : vector<1x1x16x32xf32>, vector<1x1x16x32xf32> -> vector<2x1x16x32xf32>
    %49 = vector.shape_cast %48 : vector<2x1x16x32xf32> to vector<2x16x32xf32>
    %50 = arith.truncf %49 : vector<2x16x32xf32> to vector<2x16x32xbf16>
    "tpu.trace_start"() <{level = 10 : i32, message = "bqd,bkd->bqk"}> : () -> ()
    %cst_18 = arith.constant dense<0.000000e+00> : vector<2x16x16xf32>
    %51 = tpu.matmul %30, %40, %cst_18 {dimension_numbers = #tpu.dot_dimension_numbers<[2], [2], [1], [1], [0, 0, 0, 1, 1, 1], [0], [0]>} : vector<2x16x32xbf16>, vector<2x16x32xbf16>, vector<2x16x16xf32> -> vector<2x16x16xf32>
    "tpu.trace_stop"() : () -> ()
    %c0_19 = arith.constant 0 : index
    %c0_20 = arith.constant 0 : index
    %52 = vector.load %arg4[%c0_19, %c0_20] : memref<16x16xf32, #tpu.memory_space<vmem>>, vector<16x16xf32>
    %53 = vector.shape_cast %52 : vector<16x16xf32> to vector<1x16x16xf32>
    %54 = vector.broadcast %53 : vector<1x16x16xf32> to vector<2x16x16xf32>
    %55 = arith.addf %51, %54 : vector<2x16x16xf32>
    %cst_21 = arith.constant dense<0xFF800000> : vector<2x16xf32>
    %56 = vector.multi_reduction <maximumf>, %55, %cst_21 [2] : vector<2x16x16xf32> to vector<2x16xf32>
    %57 = vector.shape_cast %56 : vector<2x16xf32> to vector<2x16x1xf32>
    %58 = vector.broadcast %57 : vector<2x16x1xf32> to vector<2x16x16xf32>
    %59 = arith.subf %55, %58 : vector<2x16x16xf32>
    %60 = math.exp %59 : vector<2x16x16xf32>
    %cst_22 = arith.constant dense<0.000000e+00> : vector<2x16xf32>
    %61 = vector.multi_reduction <add>, %60, %cst_22 [2] : vector<2x16x16xf32> to vector<2x16xf32>
    %62 = vector.shape_cast %61 : vector<2x16xf32> to vector<2x16x1xf32>
    %63 = tpu.reciprocal %62 {approx = true} : vector<2x16x1xf32> -> vector<2x16x1xf32>
    %64 = vector.broadcast %63 : vector<2x16x1xf32> to vector<2x16x16xf32>
    %65 = arith.mulf %60, %64 : vector<2x16x16xf32>
    %66 = arith.truncf %65 : vector<2x16x16xf32> to vector<2x16x16xbf16>
    "tpu.trace_start"() <{level = 10 : i32, message = "bqk,bkd->bqd"}> : () -> ()
    %cst_23 = arith.constant dense<0.000000e+00> : vector<2x16x32xf32>
    %67 = tpu.matmul %66, %50, %cst_23 {dimension_numbers = #tpu.dot_dimension_numbers<[2], [1], [1], [2], [0, 0, 0, 1, 1, 2], [0], [0]>} : vector<2x16x16xbf16>, vector<2x16x32xbf16>, vector<2x16x32xf32> -> vector<2x16x32xf32>
    "tpu.trace_stop"() : () -> ()
    %68 = vector.extract_strided_slice %67 {offsets = [0, 0, 0], sizes = [1, 16, 32], strides = [1, 1, 1]} : vector<2x16x32xf32> to vector<1x16x32xf32>
    %69 = vector.shape_cast %68 : vector<1x16x32xf32> to vector<16x32xf32>
    %70 = vector.extract_strided_slice %67 {offsets = [1, 0, 0], sizes = [1, 16, 32], strides = [1, 1, 1]} : vector<2x16x32xf32> to vector<1x16x32xf32>
    %71 = vector.shape_cast %70 : vector<1x16x32xf32> to vector<16x32xf32>
    %72 = tpu.concatenate %69, %71 in 1 : vector<16x32xf32>, vector<16x32xf32> -> vector<16x64xf32>
    %73 = arith.truncf %72 : vector<16x64xf32> to vector<16x64xbf16>
    %c0_24 = arith.constant 0 : index
    %c0_25 = arith.constant 0 : index
    %c0_26 = arith.constant 0 : index
    %74 = vector.load %arg9[%c0_24, %c0_25, %c0_26] : memref<1x64x64xbf16, #tpu.memory_space<vmem>>, vector<1x64x64xbf16>
    %75 = vector.shape_cast %74 : vector<1x64x64xbf16> to vector<64x64xbf16>
    %cst_27 = arith.constant dense<0.000000e+00> : vector<16x64xf32>
    %76 = tpu.matmul %73, %75, %cst_27 {dimension_numbers = #tpu.dot_dimension_numbers<[1], [0], [0], [1], [0, 0, 1, 1], [], []>} : vector<16x64xbf16>, vector<64x64xbf16>, vector<16x64xf32> -> vector<16x64xf32>
    %c0_28 = arith.constant 0 : index
    %c0_29 = arith.constant 0 : index
    %c0_30 = arith.constant 0 : index
    %77 = vector.load %arg10[%c0_28, %c0_29, %c0_30] : memref<1x1x64xf32, #tpu.memory_space<vmem>>, vector<1x1x64xf32>
    %78 = vector.shape_cast %77 : vector<1x1x64xf32> to vector<1x64xf32>
    %79 = vector.broadcast %78 : vector<1x64xf32> to vector<16x64xf32>
    %80 = arith.addf %76, %79 : vector<16x64xf32>
    %81 = arith.addf %4, %80 : vector<16x64xf32>
    %c0_31 = arith.constant 0 : index
    %c0_32 = arith.constant 0 : index
    %c0_33 = arith.constant 0 : index
    %82 = vector.load %arg11[%c0_31, %c0_32, %c0_33] : memref<1x2x64xf32, #tpu.memory_space<vmem>>, vector<1x2x64xf32>
    %83 = vector.shape_cast %82 : vector<1x2x64xf32> to vector<2x64xf32>
    %cst_34 = arith.constant dense<0.000000e+00> : vector<16xf32>
    %84 = vector.multi_reduction <add>, %81, %cst_34 [1] : vector<16x64xf32> to vector<16xf32>
    %85 = vector.shape_cast %84 : vector<16xf32> to vector<16x1xf32>
    %cst_35 = arith.constant 6.400000e+01 : f32
    %86 = vector.broadcast %cst_35 : f32 to vector<16x1xf32>
    %87 = arith.divf %85, %86 : vector<16x1xf32>
    %88 = vector.broadcast %87 : vector<16x1xf32> to vector<16x64xf32>
    %89 = arith.subf %81, %88 : vector<16x64xf32>
    %90 = arith.mulf %89, %89 : vector<16x64xf32>
    %cst_36 = arith.constant dense<0.000000e+00> : vector<16xf32>
    %91 = vector.multi_reduction <add>, %90, %cst_36 [1] : vector<16x64xf32> to vector<16xf32>
    %92 = vector.shape_cast %91 : vector<16xf32> to vector<16x1xf32>
    %cst_37 = arith.constant 6.400000e+01 : f32
    %93 = vector.broadcast %cst_37 : f32 to vector<16x1xf32>
    %94 = arith.divf %92, %93 : vector<16x1xf32>
    %95 = vector.broadcast %87 : vector<16x1xf32> to vector<16x64xf32>
    %96 = arith.subf %81, %95 : vector<16x64xf32>
    %cst_38 = arith.constant 9.99999974E-6 : f32
    %97 = vector.broadcast %cst_38 : f32 to vector<16x1xf32>
    %98 = arith.addf %94, %97 : vector<16x1xf32>
    %99 = math.rsqrt %98 : vector<16x1xf32>
    %100 = vector.broadcast %99 : vector<16x1xf32> to vector<16x64xf32>
    %101 = arith.mulf %96, %100 : vector<16x64xf32>
    %102 = vector.extract_strided_slice %83 {offsets = [0, 0], sizes = [1, 64], strides = [1, 1]} : vector<2x64xf32> to vector<1x64xf32>
    %103 = vector.broadcast %102 : vector<1x64xf32> to vector<16x64xf32>
    %104 = arith.mulf %101, %103 : vector<16x64xf32>
    %105 = vector.extract_strided_slice %83 {offsets = [1, 0], sizes = [1, 64], strides = [1, 1]} : vector<2x64xf32> to vector<1x64xf32>
    %106 = vector.broadcast %105 : vector<1x64xf32> to vector<16x64xf32>
    %107 = arith.addf %104, %106 : vector<16x64xf32>
    %108 = arith.truncf %107 : vector<16x64xf32> to vector<16x64xbf16>
    %c0_39 = arith.constant 0 : index
    %c0_40 = arith.constant 0 : index
    %c0_41 = arith.constant 0 : index
    %109 = vector.load %arg12[%c0_39, %c0_40, %c0_41] : memref<1x64x64xbf16, #tpu.memory_space<vmem>>, vector<1x64x64xbf16>
    %110 = vector.shape_cast %109 : vector<1x64x64xbf16> to vector<64x64xbf16>
    %cst_42 = arith.constant dense<0.000000e+00> : vector<16x64xf32>
    %111 = tpu.matmul %108, %110, %cst_42 {dimension_numbers = #tpu.dot_dimension_numbers<[1], [0], [0], [1], [0, 0, 1, 1], [], []>} : vector<16x64xbf16>, vector<64x64xbf16>, vector<16x64xf32> -> vector<16x64xf32>
    %c0_43 = arith.constant 0 : index
    %c0_44 = arith.constant 0 : index
    %c0_45 = arith.constant 0 : index
    %112 = vector.load %arg13[%c0_43, %c0_44, %c0_45] : memref<1x1x64xf32, #tpu.memory_space<vmem>>, vector<1x1x64xf32>
    %113 = vector.shape_cast %112 : vector<1x1x64xf32> to vector<1x64xf32>
    %114 = vector.broadcast %113 : vector<1x64xf32> to vector<16x64xf32>
    %115 = arith.addf %111, %114 : vector<16x64xf32>
    %cst_46 = arith.constant 0.000000e+00 : f32
    %116 = vector.broadcast %cst_46 : f32 to vector<16x64xf32>
    %117 = arith.maximumf %115, %116 : vector<16x64xf32>
    %118 = arith.truncf %117 : vector<16x64xf32> to vector<16x64xbf16>
    %c0_47 = arith.constant 0 : index
    %c0_48 = arith.constant 0 : index
    %c0_49 = arith.constant 0 : index
    %119 = vector.load %arg14[%c0_47, %c0_48, %c0_49] : memref<1x64x64xbf16, #tpu.memory_space<vmem>>, vector<1x64x64xbf16>
    %120 = vector.shape_cast %119 : vector<1x64x64xbf16> to vector<64x64xbf16>
    %cst_50 = arith.constant dense<0.000000e+00> : vector<16x64xf32>
    %121 = tpu.matmul %118, %120, %cst_50 {dimension_numbers = #tpu.dot_dimension_numbers<[1], [0], [0], [1], [0, 0, 1, 1], [], []>} : vector<16x64xbf16>, vector<64x64xbf16>, vector<16x64xf32> -> vector<16x64xf32>
    %c0_51 = arith.constant 0 : index
    %c0_52 = arith.constant 0 : index
    %c0_53 = arith.constant 0 : index
    %122 = vector.load %arg15[%c0_51, %c0_52, %c0_53] : memref<1x1x64xf32, #tpu.memory_space<vmem>>, vector<1x1x64xf32>
    %123 = vector.shape_cast %122 : vector<1x1x64xf32> to vector<1x64xf32>
    %124 = vector.broadcast %123 : vector<1x64xf32> to vector<16x64xf32>
    %125 = arith.addf %121, %124 : vector<16x64xf32>
    %126 = arith.addf %107, %125 : vector<16x64xf32>
    %c0_54 = arith.constant 0 : index
    %c0_55 = arith.constant 0 : index
    %c0_56 = arith.constant 0 : index
    %127 = vector.load %arg16[%c0_54, %c0_55, %c0_56] : memref<1x2x64xf32, #tpu.memory_space<vmem>>, vector<1x2x64xf32>
    %128 = vector.shape_cast %127 : vector<1x2x64xf32> to vector<2x64xf32>
    %cst_57 = arith.constant dense<0.000000e+00> : vector<16xf32>
    %129 = vector.multi_reduction <add>, %126, %cst_57 [1] : vector<16x64xf32> to vector<16xf32>
    %130 = vector.shape_cast %129 : vector<16xf32> to vector<16x1xf32>
    %cst_58 = arith.constant 6.400000e+01 : f32
    %131 = vector.broadcast %cst_58 : f32 to vector<16x1xf32>
    %132 = arith.divf %130, %131 : vector<16x1xf32>
    %133 = vector.broadcast %132 : vector<16x1xf32> to vector<16x64xf32>
    %134 = arith.subf %126, %133 : vector<16x64xf32>
    %135 = arith.mulf %134, %134 : vector<16x64xf32>
    %cst_59 = arith.constant dense<0.000000e+00> : vector<16xf32>
    %136 = vector.multi_reduction <add>, %135, %cst_59 [1] : vector<16x64xf32> to vector<16xf32>
    %137 = vector.shape_cast %136 : vector<16xf32> to vector<16x1xf32>
    %cst_60 = arith.constant 6.400000e+01 : f32
    %138 = vector.broadcast %cst_60 : f32 to vector<16x1xf32>
    %139 = arith.divf %137, %138 : vector<16x1xf32>
    %140 = vector.broadcast %132 : vector<16x1xf32> to vector<16x64xf32>
    %141 = arith.subf %126, %140 : vector<16x64xf32>
    %cst_61 = arith.constant 9.99999974E-6 : f32
    %142 = vector.broadcast %cst_61 : f32 to vector<16x1xf32>
    %143 = arith.addf %139, %142 : vector<16x1xf32>
    %144 = math.rsqrt %143 : vector<16x1xf32>
    %145 = vector.broadcast %144 : vector<16x1xf32> to vector<16x64xf32>
    %146 = arith.mulf %141, %145 : vector<16x64xf32>
    %147 = vector.extract_strided_slice %128 {offsets = [0, 0], sizes = [1, 64], strides = [1, 1]} : vector<2x64xf32> to vector<1x64xf32>
    %148 = vector.broadcast %147 : vector<1x64xf32> to vector<16x64xf32>
    %149 = arith.mulf %146, %148 : vector<16x64xf32>
    %150 = vector.extract_strided_slice %128 {offsets = [1, 0], sizes = [1, 64], strides = [1, 1]} : vector<2x64xf32> to vector<1x64xf32>
    %151 = vector.broadcast %150 : vector<1x64xf32> to vector<16x64xf32>
    %152 = arith.addf %149, %151 : vector<16x64xf32>
    %c0_62 = arith.constant 0 : index
    %c0_63 = arith.constant 0 : index
    %153 = vector.load %arg20[%c0_62, %c0_63] : memref<16x64xf32, #tpu.memory_space<vmem>>, vector<16x64xf32>
    tpu.vector_store %arg20[%c0_62, %c0_63], %152 {strides = array<i32>} : memref<16x64xf32, #tpu.memory_space<vmem>>, vector<16x64xf32>,
    %c1_i32 = arith.constant 1 : i32
    %154 = arith.cmpi eq, %arg1, %c1_i32 : i32
    %155 = arith.extui %154 : i1 to i32
    %c0_i32_64 = arith.constant 0 : i32
    %156 = arith.cmpi ne, %155, %c0_i32_64 : i32
    scf.if %156 {
      %c0_65 = arith.constant 0 : index
      %c0_66 = arith.constant 0 : index
      %157 = vector.load %arg17[%c0_65, %c0_66] : memref<1x64xf32, #tpu.memory_space<vmem>>, vector<1x64xf32>
      %cst_67 = arith.constant dense<0.000000e+00> : vector<1x16xf32>
      %158 = tpu.matmul %157, %152, %cst_67 {dimension_numbers = #tpu.dot_dimension_numbers<[1], [1], [0], [0], [0, 0, 1, 0], [], []>} : vector<1x64xf32>, vector<16x64xf32>, vector<1x16xf32> -> vector<1x16xf32>
      %c0_68 = arith.constant 0 : index
      %c0_69 = arith.constant 0 : index
      %159 = vector.load %arg18[%c0_68, %c0_69] : memref<1x1xf32, #tpu.memory_space<vmem>>, vector<1x1xf32>
      %160 = vector.broadcast %159 : vector<1x1xf32> to vector<1x16xf32>
      %161 = arith.addf %158, %160 : vector<1x16xf32>
      %cst_70 = arith.constant 0.000000e+00 : f32
      %162 = vector.broadcast %cst_70 : f32 to vector<1x16xf32>
      %163 = arith.subf %162, %161 : vector<1x16xf32>
      %164 = math.exp %163 : vector<1x16xf32>
      %cst_71 = arith.constant 1.000000e+00 : f32
      %165 = vector.broadcast %cst_71 : f32 to vector<1x16xf32>
      %166 = arith.addf %165, %164 : vector<1x16xf32>
      %cst_72 = arith.constant 1.000000e+00 : f32
      %167 = vector.broadcast %cst_72 : f32 to vector<1x16xf32>
      %168 = arith.divf %167, %166 : vector<1x16xf32>
      %169 = vector.shape_cast %168 : vector<1x16xf32> to vector<1x1x16xf32>
      %c0_73 = arith.constant 0 : index
      %c0_74 = arith.constant 0 : index
      %c0_75 = arith.constant 0 : index
      %170 = vector.load %arg19[%c0_73, %c0_74, %c0_75] : memref<1x1x16xf32, #tpu.memory_space<vmem>>, vector<1x1x16xf32>
      tpu.vector_store %arg19[%c0_73, %c0_74, %c0_75], %169 {strides = array<i32>} : memref<1x1x16xf32, #tpu.memory_space<vmem>>, vector<1x1x16xf32>,
    } else {
    }
    return
  }
  func.func @transform_0(%arg0: i32, %arg1: i32) -> (i32, i32, i32) {
    %c0_i32 = arith.constant 0 : i32
    %c0_i32_0 = arith.constant 0 : i32
    %c0_i32_1 = arith.constant 0 : i32
    return %arg0, %c0_i32, %c0_i32_0 : i32, i32, i32
  }
  func.func @transform_1(%arg0: i32, %arg1: i32) -> (i32, i32, i32) {
    %c0_i32 = arith.constant 0 : i32
    %c0_i32_0 = arith.constant 0 : i32
    %c0_i32_1 = arith.constant 0 : i32
    return %arg0, %c0_i32, %c0_i32_0 : i32, i32, i32
  }
  func.func @transform_2(%arg0: i32, %arg1: i32) -> (i32, i32) {
    %c0_i32 = arith.constant 0 : i32
    %c0_i32_0 = arith.constant 0 : i32
    %c0_i32_1 = arith.constant 0 : i32
    return %c0_i32, %c0_i32_0 : i32, i32
  }
  func.func @transform_3(%arg0: i32, %arg1: i32) -> (i32, i32, i32) {
    %c0_i32 = arith.constant 0 : i32
    %c0_i32_0 = arith.constant 0 : i32
    %c0_i32_1 = arith.constant 0 : i32
    return %arg1, %c0_i32, %c0_i32_0 : i32, i32, i32
  }
  func.func @transform_4(%arg0: i32, %arg1: i32) -> (i32, i32, i32) {
    %c0_i32 = arith.constant 0 : i32
    %c0_i32_0 = arith.constant 0 : i32
    %c0_i32_1 = arith.constant 0 : i32
    return %arg1, %c0_i32, %c0_i32_0 : i32, i32, i32
  }
  func.func @transform_5(%arg0: i32, %arg1: i32) -> (i32, i32, i32) {
    %c0_i32 = arith.constant 0 : i32
    %c0_i32_0 = arith.constant 0 : i32
    %c0_i32_1 = arith.constant 0 : i32
    return %arg1, %c0_i32, %c0_i32_0 : i32, i32, i32
  }
  func.func @transform_6(%arg0: i32, %arg1: i32) -> (i32, i32, i32) {
    %c0_i32 = arith.constant 0 : i32
    %c0_i32_0 = arith.constant 0 : i32
    %c0_i32_1 = arith.constant 0 : i32
    return %arg1, %c0_i32, %c0_i32_0 : i32, i32, i32
  }
  func.func @transform_7(%arg0: i32, %arg1: i32) -> (i32, i32, i32) {
    %c0_i32 = arith.constant 0 : i32
    %c0_i32_0 = arith.constant 0 : i32
    %c0_i32_1 = arith.constant 0 : i32
    return %arg1, %c0_i32, %c0_i32_0 : i32, i32, i32
  }
  func.func @transform_8(%arg0: i32, %arg1: i32) -> (i32, i32, i32) {
    %c0_i32 = arith.constant 0 : i32
    %c0_i32_0 = arith.constant 0 : i32
    %c0_i32_1 = arith.constant 0 : i32
    return %arg1, %c0_i32, %c0_i32_0 : i32, i32, i32
  }
  func.func @transform_9(%arg0: i32, %arg1: i32) -> (i32, i32, i32) {
    %c0_i32 = arith.constant 0 : i32
    %c0_i32_0 = arith.constant 0 : i32
    %c0_i32_1 = arith.constant 0 : i32
    return %arg1, %c0_i32, %c0_i32_0 : i32, i32, i32
  }
  func.func @transform_10(%arg0: i32, %arg1: i32) -> (i32, i32, i32) {
    %c0_i32 = arith.constant 0 : i32
    %c0_i32_0 = arith.constant 0 : i32
    %c0_i32_1 = arith.constant 0 : i32
    return %arg1, %c0_i32, %c0_i32_0 : i32, i32, i32
  }
  func.func @transform_11(%arg0: i32, %arg1: i32) -> (i32, i32, i32) {
    %c0_i32 = arith.constant 0 : i32
    %c0_i32_0 = arith.constant 0 : i32
    %c0_i32_1 = arith.constant 0 : i32
    return %arg1, %c0_i32, %c0_i32_0 : i32, i32, i32
  }
  func.func @transform_12(%arg0: i32, %arg1: i32) -> (i32, i32, i32) {
    %c0_i32 = arith.constant 0 : i32
    %c0_i32_0 = arith.constant 0 : i32
    %c0_i32_1 = arith.constant 0 : i32
    return %arg1, %c0_i32, %c0_i32_0 : i32, i32, i32
  }
  func.func @transform_13(%arg0: i32, %arg1: i32) -> (i32, i32, i32) {
    %c0_i32 = arith.constant 0 : i32
    %c0_i32_0 = arith.constant 0 : i32
    %c0_i32_1 = arith.constant 0 : i32
    return %arg1, %c0_i32, %c0_i32_0 : i32, i32, i32
  }
  func.func @transform_14(%arg0: i32, %arg1: i32) -> (i32, i32, i32) {
    %c0_i32 = arith.constant 0 : i32
    %c0_i32_0 = arith.constant 0 : i32
    %c0_i32_1 = arith.constant 0 : i32
    return %arg1, %c0_i32, %c0_i32_0 : i32, i32, i32
  }
  func.func @transform_15(%arg0: i32, %arg1: i32) -> (i32, i32) {
    %c0_i32 = arith.constant 0 : i32
    %c0_i32_0 = arith.constant 0 : i32
    %c0_i32_1 = arith.constant 0 : i32
    return %c0_i32, %c0_i32_0 : i32, i32
  }
  func.func @transform_16(%arg0: i32, %arg1: i32) -> (i32, i32) {
    %c0_i32 = arith.constant 0 : i32
    %c0_i32_0 = arith.constant 0 : i32
    %c0_i32_1 = arith.constant 0 : i32
    return %c0_i32, %c0_i32_0 : i32, i32
  }
  func.func @transform_17(%arg0: i32, %arg1: i32) -> (i32, i32, i32) {
    %c0_i32 = arith.constant 0 : i32
    %c0_i32_0 = arith.constant 0 : i32
    %c0_i32_1 = arith.constant 0 : i32
    return %arg0, %c0_i32, %c0_i32_0 : i32, i32, i32
  }
}

</mosaic_0001>

<llo_original>
// kernel: tpu_custom_call.1
$region0: #{tpu_custom_call.1}
  #allocation0 [shape = 'u32[]', space=smem, size = 0x4, offset = 0x4, fixed_abs, tag = 'smem constant byte address 0x4 - core index']
  #allocation1 [shape = 'u32[144,128]{1,0:T(1,128)}', space=vmem, size = 0x12000, scoped, tag = 'internal scratch']
  #allocation2 [shape = 'f32[16,64]{1,0:T(8,128)}', space=vmem, size = 0x2000, scoped, tag = 'scratch operand']
  #allocation3 [shape = 'f32[1,1]{1,0:T(1,128)S(1)}', space=vmem, size = 0x200, scoped, tag = 'scoped memory for tpu_custom_call.1']
  %s0 = inlined_call_operand.hbm [shape: f32[2,16,64], index: 0, kind: input, shape index: {}]
  %s1 = inlined_call_operand.hbm [shape: f32[2,16,64], index: 1, kind: input, shape index: {}]
  %s2 = inlined_call_operand.hbm [shape: f32[16,16], index: 2, kind: input, shape index: {}]
  %s3 = inlined_call_operand.hbm [shape: bf16[2,64,64], index: 3, kind: input, shape index: {}]
  %s4 = inlined_call_operand.hbm [shape: bf16[2,64,128], index: 4, kind: input, shape index: {}]
  %s5 = inlined_call_operand.vmem [shape: f32[2,1,64], index: 5, kind: input, shape index: {}]
  %s6 = inlined_call_operand.vmem [shape: f32[2,1,128], index: 6, kind: input, shape index: {}]
  %s7 = inlined_call_operand.hbm [shape: bf16[2,64,64], index: 7, kind: input, shape index: {}]
  %s8 = inlined_call_operand.vmem [shape: f32[2,1,64], index: 8, kind: input, shape index: {}]
  %s9 = inlined_call_operand.vmem [shape: f32[2,2,64], index: 9, kind: input, shape index: {}]
  %s10 = inlined_call_operand.hbm [shape: bf16[2,64,64], index: 10, kind: input, shape index: {}]
  %s11 = inlined_call_operand.vmem [shape: f32[2,1,64], index: 11, kind: input, shape index: {}]
  %s12 = inlined_call_operand.hbm [shape: bf16[2,64,64], index: 12, kind: input, shape index: {}]
  %s13 = inlined_call_operand.vmem [shape: f32[2,1,64], index: 13, kind: input, shape index: {}]
  %s14 = inlined_call_operand.vmem [shape: f32[2,2,64], index: 14, kind: input, shape index: {}]
  %s15 = inlined_call_operand.vmem [shape: f32[1,64], index: 15, kind: input, shape index: {}]
  %s16 = inlined_call_operand.<no memory space> [shape: f32[1,1], index: 16, kind: input, shape index: {}]
  %s17 = inlined_call_operand.hbm [shape: f32[2,1,16], index: 17, kind: output, shape index: {}]
  %s18 = sld [smem:[#allocation0]]
  $region141: #{tpu_custom_call.1} parent=0
    _
  %s20 = ssub.s32 1, %s18
  %s21 = scalar_select 0, %s20, %s18
  %v22 = vstv %s16
  %23 = vst [vmem:[#allocation3] sm:$0x1] %v22
  $region1: #{tpu_custom_call.1} parent=0
    #allocation4 [shape = 'u8[16384]{0}', space=vmem, size = 0x4000, scoped, tag = 'input window, operand 0']
    #allocation5 [shape = 's32[2]{0}', space=sflag, size = 0x8, scoped, tag = 'scoped memory for tpu_custom_call.1']
    #allocation6 [shape = 's32[2]{0}', space=sflag, size = 0x8, scoped, tag = 'scoped memory for tpu_custom_call.1']
    #allocation7 [shape = 'u8[16384]{0}', space=vmem, size = 0x4000, scoped, tag = 'input window, operand 1']
    #allocation8 [shape = 's32[2]{0}', space=sflag, size = 0x8, scoped, tag = 'scoped memory for tpu_custom_call.1']
    #allocation9 [shape = 'u8[8192]{0}', space=vmem, size = 0x2000, scoped, tag = 'input window, operand 2, single buffered']
    #allocation10 [shape = 'u8[32768]{0}', space=vmem, size = 0x8000, scoped, tag = 'input window, operand 3']
    #allocation11 [shape = 's32[2]{0}', space=sflag, size = 0x8, scoped, tag = 'scoped memory for tpu_custom_call.1']
    #allocation12 [shape = 'u8[32768]{0}', space=vmem, size = 0x8000, scoped, tag = 'input window, operand 4']
    #allocation13 [shape = 'u8[32768]{0}', space=vmem, size = 0x8000, scoped, tag = 'input window, operand 7']
    #allocation14 [shape = 's32[2]{0}', space=sflag, size = 0x8, scoped, tag = 'scoped memory for tpu_custom_call.1']
    #allocation15 [shape = 'u8[32768]{0}', space=vmem, size = 0x8000, scoped, tag = 'input window, operand 10']
    #allocation16 [shape = 'u8[32768]{0}', space=vmem, size = 0x8000, scoped, tag = 'input window, operand 12']
    #allocation17 [shape = 's32[2]{0}', space=sflag, size = 0x8, scoped, tag = 'scoped memory for tpu_custom_call.1']
    #allocation18 [shape = 'u8[1024]{0}', space=vmem, size = 0x400, scoped, tag = 'output window, operand 0']
    %24 = vsyncpa [#allocation5], 0
    %s25 = scalar_lea.sflag [#allocation5], 1
    %26 = vsyncpa %s25, 0
    %27 = vsyncpa [#allocation8], 0
    %s28 = scalar_lea.sflag [#allocation8], 1
    %29 = vsyncpa %s28, 0
    %30 = vsyncpa [#allocation11], 0
    %s31 = scalar_lea.sflag [#allocation11], 1
    %32 = vsyncpa %s31, 0
    %33 = vsyncpa [#allocation14], 0
    %s34 = scalar_lea.sflag [#allocation14], 1
    %35 = vsyncpa %s34, 0
    %36 = vsyncpa [#allocation17], 0
    %s37 = scalar_lea.sflag [#allocation17], 1
    %38 = vsyncpa %s37, 0
    %39 = vsyncpa [#allocation6], 0
    %s40 = scalar_lea.sflag [#allocation6], 1
    %41 = vsyncpa %s40, 0
    loop: start=0, step=1, limit=6
    $region2: #{tpu_custom_call.1} parent=1 // loop_pre_header
      _
    $region3: #{tpu_custom_call.1} parent=1 // loop_header
      %s43 = sphi 0, %s47
      %p44 = scmp.ge.s32.totalorder %s43, 6
      %s50 = sphi 0, %s62
      %s51 = sphi 0, %s58
      %s52 = sphi 0, %s50
      %s53 = sphi 0, %s51
      %s54 = sphi 0, %s52
      %s55 = sphi 0, %s53
      %s65 = sphi 0, %s67
      %s68 = sphi 0, %s65
      %s69 = sphi 0, %s68
      %s85 = sphi 0, %s69
      %s91 = sphi 0, %s93
      %s94 = sphi 0, %s91
      %s95 = sphi 0, %s94
      %s111 = sphi 0, %s95
      %s115 = sphi 0, %s115
      %s117 = sphi 0, %s115
      %s118 = sphi 0, %s117
      %s132 = sphi 0, %s118
      %s138 = sphi 0, %s140
      %s141 = sphi 0, %s138
      %s142 = sphi 0, %s141
      %s158 = sphi 0, %s142
      %s164 = sphi 0, %s166
      %s167 = sphi 0, %s164
      %s168 = sphi 0, %s167
      %s184 = sphi 0, %s168
      %s190 = sphi 0, %s192
      %s193 = sphi 0, %s190
      %s194 = sphi 0, %s193
      %s210 = sphi 0, %s194
      %s216 = sphi 0, %s218
      %s219 = sphi 0, %s216
      %s220 = sphi 0, %s219
      %s236 = sphi 0, %s220
      %s242 = sphi 0, %s244
      %s245 = sphi 0, %s242
      %s246 = sphi 0, %s245
      %s262 = sphi 0, %s246
      %s268 = sphi 0, %s270
      %s271 = sphi 0, %s268
      %s272 = sphi 0, %s271
      %s288 = sphi 0, %s272
      %s294 = sphi 0, %s296
      %s297 = sphi 0, %s294
      %s298 = sphi 0, %s297
      %s314 = sphi 0, %s298
      %s320 = sphi 0, %s322
      %s323 = sphi 0, %s320
      %s324 = sphi 0, %s323
      %s340 = sphi 0, %s324
      %s346 = sphi 0, %s348
      %s349 = sphi 0, %s346
      %s350 = sphi 0, %s349
      %s366 = sphi 0, %s350
      %s372 = sphi 0, %s374
      %s375 = sphi 0, %s372
      %s376 = sphi 0, %s375
      %s392 = sphi 0, %s376
      %s398 = sphi 0, %s400
      %s401 = sphi 0, %s398
      %s402 = sphi 0, %s401
      %s418 = sphi 0, %s402
      %s424 = sphi 0, %s426
      %s427 = sphi 0, %s424
      %s428 = sphi 0, %s427
      %s444 = sphi 0, %s428
      %s448 = sphi 0, %s448
      %s450 = sphi 0, %s448
      %s451 = sphi 0, %s450
      %s465 = sphi 0, %s451
      %s469 = sphi 0, %s469
      %s471 = sphi 0, %s469
      %s472 = sphi 0, %s471
      %s486 = sphi 0, %s472
      %s492 = sphi 0, %s494
      %s495 = sphi 0, %s492
      %s496 = sphi 0, %s495
      %s512 = sphi 0, %s496
    $region4: #{tpu_custom_call.1} parent=1 // loop_header_branch
      %46 = sbr.rel (%p44) target = $region8
    $region5: #{tpu_custom_call.1} parent=1 // loop_body
      %s48 = ssub.s32 %s43, 1
      %s49 = ssub.s32 %s43, 2
      %s56 = sadd.s32 1, %s51
      %p57 = scmp.ge.s32.totalorder %s56, 2
      %s58 = scalar_select %p57, 0, %s56
      %s59 = sadd.s32 1, %s50
      %s60 = scalar_select %p57, %s59, %s50
      %p61 = scmp.ge.s32.totalorder %s60, 2
      %s62 = scalar_select %p61, 0, %s60
      %s63 = ssub.s32 %s50, %s62
      %p64 = scmp.eq.s32.totalorder %s63, 0
      %s66 = sadd.s32 %s65, 1
      %s67 = scalar_select %p64, %s65, %s66
      %p70 = pneg %p64
      %p71 = scmp.eq.s32.totalorder %s43, 3
      %p72 = por %p70, %p71
      %p73 = scmp.ne.s32.totalorder %s65, %s68
      %p74 = scmp.eq.s32.totalorder %s43, 0
      %p75 = por %p73, %p74
      %p76 = scmp.ne.s32.totalorder %s65, %s68
      %p77 = scmp.eq.s32.totalorder %s48, 3
      %p78 = por %p76, %p77
      %p79 = scmp.ne.s32.totalorder %s68, %s69
      %p80 = scmp.eq.s32.totalorder %s48, 0
      %p81 = por %p79, %p80
      %p82 = scmp.ne.s32.totalorder %s68, %s69
      %p83 = scmp.eq.s32.totalorder %s49, 3
      %p84 = por %p82, %p83
      %p86 = scmp.ne.s32.totalorder %s69, %s85
      %p87 = scmp.eq.s32.totalorder %s49, 0
      %p88 = por %p86, %p87
      %s89 = ssub.s32 %s50, %s62
      %p90 = scmp.eq.s32.totalorder %s89, 0
      %s92 = sadd.s32 %s91, 1
      %s93 = scalar_select %p90, %s91, %s92
      %p96 = pneg %p90
      %p97 = scmp.eq.s32.totalorder %s43, 3
      %p98 = por %p96, %p97
      %p99 = scmp.ne.s32.totalorder %s91, %s94
      %p100 = scmp.eq.s32.totalorder %s43, 0
      %p101 = por %p99, %p100
      %p102 = scmp.ne.s32.totalorder %s91, %s94
      %p103 = scmp.eq.s32.totalorder %s48, 3
      %p104 = por %p102, %p103
      %p105 = scmp.ne.s32.totalorder %s94, %s95
      %p106 = scmp.eq.s32.totalorder %s48, 0
      %p107 = por %p105, %p106
      %p108 = scmp.ne.s32.totalorder %s94, %s95
      %p109 = scmp.eq.s32.totalorder %s49, 3
      %p110 = por %p108, %p109
      %p112 = scmp.ne.s32.totalorder %s95, %s111
      %p113 = scmp.eq.s32.totalorder %s49, 0
      %p114 = por %p112, %p113
      %s116 = sadd.s32 %s115, 1
      %p119 = scmp.eq.s32.totalorder %s43, 3
      %p120 = scmp.ne.s32.totalorder %s115, %s117
      %p121 = scmp.eq.s32.totalorder %s43, 0
      %p122 = por %p120, %p121
      %p123 = scmp.ne.s32.totalorder %s115, %s117
      %p124 = scmp.eq.s32.totalorder %s48, 3
      %p125 = por %p123, %p124
      %p126 = scmp.ne.s32.totalorder %s117, %s118
      %p127 = scmp.eq.s32.totalorder %s48, 0
      %p128 = por %p126, %p127
      %p129 = scmp.ne.s32.totalorder %s117, %s118
      %p130 = scmp.eq.s32.totalorder %s49, 3
      %p131 = por %p129, %p130
      %p133 = scmp.ne.s32.totalorder %s118, %s132
      %p134 = scmp.eq.s32.totalorder %s49, 0
      %p135 = por %p133, %p134
      %s136 = ssub.s32 %s51, %s58
      %p137 = scmp.eq.s32.totalorder %s136, 0
      %s139 = sadd.s32 %s138, 1
      %s140 = scalar_select %p137, %s138, %s139
      %p143 = pneg %p137
      %p144 = scmp.eq.s32.totalorder %s43, 3
      %p145 = por %p143, %p144
      %p146 = scmp.ne.s32.totalorder %s138, %s141
      %p147 = scmp.eq.s32.totalorder %s43, 0
      %p148 = por %p146, %p147
      %p149 = scmp.ne.s32.totalorder %s138, %s141
      %p150 = scmp.eq.s32.totalorder %s48, 3
      %p151 = por %p149, %p150
      %p152 = scmp.ne.s32.totalorder %s141, %s142
      %p153 = scmp.eq.s32.totalorder %s48, 0
      %p154 = por %p152, %p153
      %p155 = scmp.ne.s32.totalorder %s141, %s142
      %p156 = scmp.eq.s32.totalorder %s49, 3
      %p157 = por %p155, %p156
      %p159 = scmp.ne.s32.totalorder %s142, %s158
      %p160 = scmp.eq.s32.totalorder %s49, 0
      %p161 = por %p159, %p160
      %s162 = ssub.s32 %s51, %s58
      %p163 = scmp.eq.s32.totalorder %s162, 0
      %s165 = sadd.s32 %s164, 1
      %s166 = scalar_select %p163, %s164, %s165
      %p169 = pneg %p163
      %p170 = scmp.eq.s32.totalorder %s43, 3
      %p171 = por %p169, %p170
      %p172 = scmp.ne.s32.totalorder %s164, %s167
      %p173 = scmp.eq.s32.totalorder %s43, 0
      %p174 = por %p172, %p173
      %p175 = scmp.ne.s32.totalorder %s164, %s167
      %p176 = scmp.eq.s32.totalorder %s48, 3
      %p177 = por %p175, %p176
      %p178 = scmp.ne.s32.totalorder %s167, %s168
      %p179 = scmp.eq.s32.totalorder %s48, 0
      %p180 = por %p178, %p179
      %p181 = scmp.ne.s32.totalorder %s167, %s168
      %p182 = scmp.eq.s32.totalorder %s49, 3
      %p183 = por %p181, %p182
      %p185 = scmp.ne.s32.totalorder %s168, %s184
      %p186 = scmp.eq.s32.totalorder %s49, 0
      %p187 = por %p185, %p186
      %s188 = ssub.s32 %s51, %s58
      %p189 = scmp.eq.s32.totalorder %s188, 0
      %s191 = sadd.s32 %s190, 1
      %s192 = scalar_select %p189, %s190, %s191
      %p195 = pneg %p189
      %p196 = scmp.eq.s32.totalorder %s43, 3
      %p197 = por %p195, %p196
      %p198 = scmp.ne.s32.totalorder %s190, %s193
      %p199 = scmp.eq.s32.totalorder %s43, 0
      %p200 = por %p198, %p199
      %p201 = scmp.ne.s32.totalorder %s190, %s193
      %p202 = scmp.eq.s32.totalorder %s48, 3
      %p203 = por %p201, %p202
      %p204 = scmp.ne.s32.totalorder %s193, %s194
      %p205 = scmp.eq.s32.totalorder %s48, 0
      %p206 = por %p204, %p205
      %p207 = scmp.ne.s32.totalorder %s193, %s194
      %p208 = scmp.eq.s32.totalorder %s49, 3
      %p209 = por %p207, %p208
      %p211 = scmp.ne.s32.totalorder %s194, %s210
      %p212 = scmp.eq.s32.totalorder %s49, 0
      %p213 = por %p211, %p212
      %s214 = ssub.s32 %s51, %s58
      %p215 = scmp.eq.s32.totalorder %s214, 0
      %s217 = sadd.s32 %s216, 1
      %s218 = scalar_select %p215, %s216, %s217
      %p221 = pneg %p215
      %p222 = scmp.eq.s32.totalorder %s43, 3
      %p223 = por %p221, %p222
      %p224 = scmp.ne.s32.totalorder %s216, %s219
      %p225 = scmp.eq.s32.totalorder %s43, 0
      %p226 = por %p224, %p225
      %p227 = scmp.ne.s32.totalorder %s216, %s219
      %p228 = scmp.eq.s32.totalorder %s48, 3
      %p229 = por %p227, %p228
      %p230 = scmp.ne.s32.totalorder %s219, %s220
      %p231 = scmp.eq.s32.totalorder %s48, 0
      %p232 = por %p230, %p231
      %p233 = scmp.ne.s32.totalorder %s219, %s220
      %p234 = scmp.eq.s32.totalorder %s49, 3
      %p235 = por %p233, %p234
      %p237 = scmp.ne.s32.totalorder %s220, %s236
      %p238 = scmp.eq.s32.totalorder %s49, 0
      %p239 = por %p237, %p238
      %s240 = ssub.s32 %s51, %s58
      %p241 = scmp.eq.s32.totalorder %s240, 0
      %s243 = sadd.s32 %s242, 1
      %s244 = scalar_select %p241, %s242, %s243
      %p247 = pneg %p241
      %p248 = scmp.eq.s32.totalorder %s43, 3
      %p249 = por %p247, %p248
      %p250 = scmp.ne.s32.totalorder %s242, %s245
      %p251 = scmp.eq.s32.totalorder %s43, 0
      %p252 = por %p250, %p251
      %p253 = scmp.ne.s32.totalorder %s242, %s245
      %p254 = scmp.eq.s32.totalorder %s48, 3
      %p255 = por %p253, %p254
      %p256 = scmp.ne.s32.totalorder %s245, %s246
      %p257 = scmp.eq.s32.totalorder %s48, 0
      %p258 = por %p256, %p257
      %p259 = scmp.ne.s32.totalorder %s245, %s246
      %p260 = scmp.eq.s32.totalorder %s49, 3
      %p261 = por %p259, %p260
      %p263 = scmp.ne.s32.totalorder %s246, %s262
      %p264 = scmp.eq.s32.totalorder %s49, 0
      %p265 = por %p263, %p264
      %s266 = ssub.s32 %s51, %s58
      %p267 = scmp.eq.s32.totalorder %s266, 0
      %s269 = sadd.s32 %s268, 1
      %s270 = scalar_select %p267, %s268, %s269
      %p273 = pneg %p267
      %p274 = scmp.eq.s32.totalorder %s43, 3
      %p275 = por %p273, %p274
      %p276 = scmp.ne.s32.totalorder %s268, %s271
      %p277 = scmp.eq.s32.totalorder %s43, 0
      %p278 = por %p276, %p277
      %p279 = scmp.ne.s32.totalorder %s268, %s271
      %p280 = scmp.eq.s32.totalorder %s48, 3
      %p281 = por %p279, %p280
      %p282 = scmp.ne.s32.totalorder %s271, %s272
      %p283 = scmp.eq.s32.totalorder %s48, 0
      %p284 = por %p282, %p283
      %p285 = scmp.ne.s32.totalorder %s271, %s272
      %p286 = scmp.eq.s32.totalorder %s49, 3
      %p287 = por %p285, %p286
      %p289 = scmp.ne.s32.totalorder %s272, %s288
      %p290 = scmp.eq.s32.totalorder %s49, 0
      %p291 = por %p289, %p290
      %s292 = ssub.s32 %s51, %s58
      %p293 = scmp.eq.s32.totalorder %s292, 0
      %s295 = sadd.s32 %s294, 1
      %s296 = scalar_select %p293, %s294, %s295
      %p299 = pneg %p293
      %p300 = scmp.eq.s32.totalorder %s43, 3
      %p301 = por %p299, %p300
      %p302 = scmp.ne.s32.totalorder %s294, %s297
      %p303 = scmp.eq.s32.totalorder %s43, 0
      %p304 = por %p302, %p303
      %p305 = scmp.ne.s32.totalorder %s294, %s297
      %p306 = scmp.eq.s32.totalorder %s48, 3
      %p307 = por %p305, %p306
      %p308 = scmp.ne.s32.totalorder %s297, %s298
      %p309 = scmp.eq.s32.totalorder %s48, 0
      %p310 = por %p308, %p309
      %p311 = scmp.ne.s32.totalorder %s297, %s298
      %p312 = scmp.eq.s32.totalorder %s49, 3
      %p313 = por %p311, %p312
      %p315 = scmp.ne.s32.totalorder %s298, %s314
      %p316 = scmp.eq.s32.totalorder %s49, 0
      %p317 = por %p315, %p316
      %s318 = ssub.s32 %s51, %s58
      %p319 = scmp.eq.s32.totalorder %s318, 0
      %s321 = sadd.s32 %s320, 1
      %s322 = scalar_select %p319, %s320, %s321
      %p325 = pneg %p319
      %p326 = scmp.eq.s32.totalorder %s43, 3
      %p327 = por %p325, %p326
      %p328 = scmp.ne.s32.totalorder %s320, %s323
      %p329 = scmp.eq.s32.totalorder %s43, 0
      %p330 = por %p328, %p329
      %p331 = scmp.ne.s32.totalorder %s320, %s323
      %p332 = scmp.eq.s32.totalorder %s48, 3
      %p333 = por %p331, %p332
      %p334 = scmp.ne.s32.totalorder %s323, %s324
      %p335 = scmp.eq.s32.totalorder %s48, 0
      %p336 = por %p334, %p335
      %p337 = scmp.ne.s32.totalorder %s323, %s324
      %p338 = scmp.eq.s32.totalorder %s49, 3
      %p339 = por %p337, %p338
      %p341 = scmp.ne.s32.totalorder %s324, %s340
      %p342 = scmp.eq.s32.totalorder %s49, 0
      %p343 = por %p341, %p342
      %s344 = ssub.s32 %s51, %s58
      %p345 = scmp.eq.s32.totalorder %s344, 0
      %s347 = sadd.s32 %s346, 1
      %s348 = scalar_select %p345, %s346, %s347
      %p351 = pneg %p345
      %p352 = scmp.eq.s32.totalorder %s43, 3
      %p353 = por %p351, %p352
      %p354 = scmp.ne.s32.totalorder %s346, %s349
      %p355 = scmp.eq.s32.totalorder %s43, 0
      %p356 = por %p354, %p355
      %p357 = scmp.ne.s32.totalorder %s346, %s349
      %p358 = scmp.eq.s32.totalorder %s48, 3
      %p359 = por %p357, %p358
      %p360 = scmp.ne.s32.totalorder %s349, %s350
      %p361 = scmp.eq.s32.totalorder %s48, 0
      %p362 = por %p360, %p361
      %p363 = scmp.ne.s32.totalorder %s349, %s350
      %p364 = scmp.eq.s32.totalorder %s49, 3
      %p365 = por %p363, %p364
      %p367 = scmp.ne.s32.totalorder %s350, %s366
      %p368 = scmp.eq.s32.totalorder %s49, 0
      %p369 = por %p367, %p368
      %s370 = ssub.s32 %s51, %s58
      %p371 = scmp.eq.s32.totalorder %s370, 0
      %s373 = sadd.s32 %s372, 1
      %s374 = scalar_select %p371, %s372, %s373
      %p377 = pneg %p371
      %p378 = scmp.eq.s32.totalorder %s43, 3
      %p379 = por %p377, %p378
      %p380 = scmp.ne.s32.totalorder %s372, %s375
      %p381 = scmp.eq.s32.totalorder %s43, 0
      %p382 = por %p380, %p381
      %p383 = scmp.ne.s32.totalorder %s372, %s375
      %p384 = scmp.eq.s32.totalorder %s48, 3
      %p385 = por %p383, %p384
      %p386 = scmp.ne.s32.totalorder %s375, %s376
      %p387 = scmp.eq.s32.totalorder %s48, 0
      %p388 = por %p386, %p387
      %p389 = scmp.ne.s32.totalorder %s375, %s376
      %p390 = scmp.eq.s32.totalorder %s49, 3
      %p391 = por %p389, %p390
      %p393 = scmp.ne.s32.totalorder %s376, %s392
      %p394 = scmp.eq.s32.totalorder %s49, 0
      %p395 = por %p393, %p394
      %s396 = ssub.s32 %s51, %s58
      %p397 = scmp.eq.s32.totalorder %s396, 0
      %s399 = sadd.s32 %s398, 1
      %s400 = scalar_select %p397, %s398, %s399
      %p403 = pneg %p397
      %p404 = scmp.eq.s32.totalorder %s43, 3
      %p405 = por %p403, %p404
      %p406 = scmp.ne.s32.totalorder %s398, %s401
      %p407 = scmp.eq.s32.totalorder %s43, 0
      %p408 = por %p406, %p407
      %p409 = scmp.ne.s32.totalorder %s398, %s401
      %p410 = scmp.eq.s32.totalorder %s48, 3
      %p411 = por %p409, %p410
      %p412 = scmp.ne.s32.totalorder %s401, %s402
      %p413 = scmp.eq.s32.totalorder %s48, 0
      %p414 = por %p412, %p413
      %p415 = scmp.ne.s32.totalorder %s401, %s402
      %p416 = scmp.eq.s32.totalorder %s49, 3
      %p417 = por %p415, %p416
      %p419 = scmp.ne.s32.totalorder %s402, %s418
      %p420 = scmp.eq.s32.totalorder %s49, 0
      %p421 = por %p419, %p420
      %s422 = ssub.s32 %s51, %s58
      %p423 = scmp.eq.s32.totalorder %s422, 0
      %s425 = sadd.s32 %s424, 1
      %s426 = scalar_select %p423, %s424, %s425
      %p429 = pneg %p423
      %p430 = scmp.eq.s32.totalorder %s43, 3
      %p431 = por %p429, %p430
      %p432 = scmp.ne.s32.totalorder %s424, %s427
      %p433 = scmp.eq.s32.totalorder %s43, 0
      %p434 = por %p432, %p433
      %p435 = scmp.ne.s32.totalorder %s424, %s427
      %p436 = scmp.eq.s32.totalorder %s48, 3
      %p437 = por %p435, %p436
      %p438 = scmp.ne.s32.totalorder %s427, %s428
      %p439 = scmp.eq.s32.totalorder %s48, 0
      %p440 = por %p438, %p439
      %p441 = scmp.ne.s32.totalorder %s427, %s428
      %p442 = scmp.eq.s32.totalorder %s49, 3
      %p443 = por %p441, %p442
      %p445 = scmp.ne.s32.totalorder %s428, %s444
      %p446 = scmp.eq.s32.totalorder %s49, 0
      %p447 = por %p445, %p446
      %s449 = sadd.s32 %s448, 1
      %p452 = scmp.eq.s32.totalorder %s43, 3
      %p453 = scmp.ne.s32.totalorder %s448, %s450
      %p454 = scmp.eq.s32.totalorder %s43, 0
      %p455 = por %p453, %p454
      %p456 = scmp.ne.s32.totalorder %s448, %s450
      %p457 = scmp.eq.s32.totalorder %s48, 3
      %p458 = por %p456, %p457
      %p459 = scmp.ne.s32.totalorder %s450, %s451
      %p460 = scmp.eq.s32.totalorder %s48, 0
      %p461 = por %p459, %p460
      %p462 = scmp.ne.s32.totalorder %s450, %s451
      %p463 = scmp.eq.s32.totalorder %s49, 3
      %p464 = por %p462, %p463
      %p466 = scmp.ne.s32.totalorder %s451, %s465
      %p467 = scmp.eq.s32.totalorder %s49, 0
      %p468 = por %p466, %p467
      %s470 = sadd.s32 %s469, 1
      %p473 = scmp.eq.s32.totalorder %s43, 3
      %p474 = scmp.ne.s32.totalorder %s469, %s471
      %p475 = scmp.eq.s32.totalorder %s43, 0
      %p476 = por %p474, %p475
      %p477 = scmp.ne.s32.totalorder %s469, %s471
      %p478 = scmp.eq.s32.totalorder %s48, 3
      %p479 = por %p477, %p478
      %p480 = scmp.ne.s32.totalorder %s471, %s472
      %p481 = scmp.eq.s32.totalorder %s48, 0
      %p482 = por %p480, %p481
      %p483 = scmp.ne.s32.totalorder %s471, %s472
      %p484 = scmp.eq.s32.totalorder %s49, 3
      %p485 = por %p483, %p484
      %p487 = scmp.ne.s32.totalorder %s472, %s486
      %p488 = scmp.eq.s32.totalorder %s49, 0
      %p489 = por %p487, %p488
      %s490 = ssub.s32 %s50, %s62
      %p491 = scmp.eq.s32.totalorder %s490, 0
      %s493 = sadd.s32 %s492, 1
      %s494 = scalar_select %p491, %s492, %s493
      %p497 = pneg %p491
      %p498 = scmp.eq.s32.totalorder %s43, 3
      %p499 = por %p497, %p498
      %p500 = scmp.ne.s32.totalorder %s492, %s495
      %p501 = scmp.eq.s32.totalorder %s43, 0
      %p502 = por %p500, %p501
      %p503 = scmp.ne.s32.totalorder %s492, %s495
      %p504 = scmp.eq.s32.totalorder %s48, 3
      %p505 = por %p503, %p504
      %p506 = scmp.ne.s32.totalorder %s495, %s496
      %p507 = scmp.eq.s32.totalorder %s48, 0
      %p508 = por %p506, %p507
      %p509 = scmp.ne.s32.totalorder %s495, %s496
      %p510 = scmp.eq.s32.totalorder %s49, 3
      %p511 = por %p509, %p510
      %p513 = scmp.ne.s32.totalorder %s496, %s512
      %p514 = scmp.eq.s32.totalorder %s49, 0
      %p515 = por %p513, %p514
      %p516 = scmp.le.s32.totalorder 1, %s43
      %p517 = scmp.lt.s32.totalorder %s43, 5
      %p518 = pnand %p516, %p517
      %p519 = pneg %p518
      // Predicated region
      $region9: #{tpu_custom_call.1} parent=5 // pred_check
        _
      $region10: #{tpu_custom_call.1} parent=5 // pred_check_branch
        %521 = sbr.rel (%p518) target = $region12
      $region11: #{tpu_custom_call.1} parent=5 // pred_region
        %s522 = ssub.s32 %s43, 1
        // Predicated region
        $region13: #{tpu_custom_call.1} parent=11 // pred_check
          %p523 = pneg %p128
        $region14: #{tpu_custom_call.1} parent=11 // pred_check_branch
          %525 = sbr.rel (%p523) target = $region16
        $region15: #{tpu_custom_call.1} parent=11 // pred_region
          %s527 = ssub.s32 256, 256
          %528 = vsyncadd [#allocation8], %s527
          %s529 = sshll.u32 [#allocation9], 4
          %s530 = int_to_ptr.vmem [resolvable:$true] %s529
          %535 = dma.hbm_to_vmem [thread:$0]  %s2, 256, %s530, [#allocation8], 128, 128, 8
        $region16: #{tpu_custom_call.1} parent=11 // pred_fallthru
          _
        // Predicated region
        $region17: #{tpu_custom_call.1} parent=11 // pred_check
          %p536 = pneg %p461
        $region18: #{tpu_custom_call.1} parent=11 // pred_check_branch
          %538 = sbr.rel (%p536) target = $region20
        $region19: #{tpu_custom_call.1} parent=11 // pred_region
          _
        $region20: #{tpu_custom_call.1} parent=11 // pred_fallthru
          _
        // Predicated region
        $region21: #{tpu_custom_call.1} parent=11 // pred_check
          %p539 = pneg %p482
        $region22: #{tpu_custom_call.1} parent=11 // pred_check_branch
          %541 = sbr.rel (%p539) target = $region24
        $region23: #{tpu_custom_call.1} parent=11 // pred_region
          _
        $region24: #{tpu_custom_call.1} parent=11 // pred_fallthru
          _
      $region12: #{tpu_custom_call.1} parent=5 // pred_fallthru
        _
      %p542 = scmp.lt.s32.totalorder %s43, 4
      // Predicated region
      $region25: #{tpu_custom_call.1} parent=5 // pred_check
        %p543 = pneg %p542
      $region26: #{tpu_custom_call.1} parent=5 // pred_check_branch
        %545 = sbr.rel (%p543) target = $region28
      $region27: #{tpu_custom_call.1} parent=5 // pred_region
        // Predicated region
        $region29: #{tpu_custom_call.1} parent=27 // pred_check
          %p546 = pneg %p75
        $region30: #{tpu_custom_call.1} parent=27 // pred_check_branch
          %548 = sbr.rel (%p546) target = $region32
        $region31: #{tpu_custom_call.1} parent=27 // pred_region
          %s549 = sand.u32 %s65, 1
          %s550 = scalar_lea.sflag [#allocation5], %s549
          %s551 = sand.u32 %s65, 1
          %s552 = smul.addr %s551, 16
          %s553 = scalar_lea.vmem [#allocation4], %s552
          %s555 = ssub.s32 256, 256
          %556 = vsyncadd %s550, %s555
          %s557 = smul.addr %s50, 2
          %s558 = smul.addr %s557, 128
          %s559 = scalar_lea.hbm %s0, %s558
          %s560 = sshll.u32 %s553, 4
          %s561 = int_to_ptr.vmem [resolvable:$true] %s560
          %566 = dma.hbm_to_vmem [thread:$0]  %s559, 256, %s561, %s550, 128, 128, 8
        $region32: #{tpu_custom_call.1} parent=27 // pred_fallthru
          _
        // Predicated region
        $region33: #{tpu_custom_call.1} parent=27 // pred_check
          %p567 = pneg %p101
        $region34: #{tpu_custom_call.1} parent=27 // pred_check_branch
          %569 = sbr.rel (%p567) target = $region36
        $region35: #{tpu_custom_call.1} parent=27 // pred_region
          %s570 = sand.u32 %s43, 1
          %s571 = scalar_lea.sflag [#allocation8], %s570
          %s572 = sand.u32 %s91, 1
          %s573 = smul.addr %s572, 16
          %s574 = scalar_lea.vmem [#allocation7], %s573
          %s576 = ssub.s32 256, 256
          %577 = vsyncadd %s571, %s576
          %s578 = smul.addr %s50, 2
          %s579 = smul.addr %s578, 128
          %s580 = scalar_lea.hbm %s1, %s579
          %s581 = sshll.u32 %s574, 4
          %s582 = int_to_ptr.vmem [resolvable:$true] %s581
          %587 = dma.hbm_to_vmem [thread:$0]  %s580, 256, %s582, %s571, 128, 128, 8
        $region36: #{tpu_custom_call.1} parent=27 // pred_fallthru
          _
        // Predicated region
        $region37: #{tpu_custom_call.1} parent=27 // pred_check
          %p588 = pneg %p148
        $region38: #{tpu_custom_call.1} parent=27 // pred_check_branch
          %590 = sbr.rel (%p588) target = $region40
        $region39: #{tpu_custom_call.1} parent=27 // pred_region
          %s591 = sand.u32 %s43, 1
          %s592 = scalar_lea.sflag [#allocation11], %s591
          %s593 = sand.u32 %s138, 1
          %s594 = smul.addr %s593, 32
          %s595 = scalar_lea.vmem [#allocation10], %s594
          %s597 = ssub.s32 512, 512
          %598 = vsyncadd %s592, %s597
          %s599 = smul.addr %s51, 8
          %s600 = smul.addr %s599, 64
          %s601 = scalar_lea.hbm %s3, %s600
          %s602 = sshll.u32 %s595, 4
          %s603 = int_to_ptr.vmem [resolvable:$true] %s602
          %608 = dma.hbm_to_vmem [thread:$0]  %s601, 512, %s603, %s592, 64, 64, 4
        $region40: #{tpu_custom_call.1} parent=27 // pred_fallthru
          _
        // Predicated region
        $region41: #{tpu_custom_call.1} parent=27 // pred_check
          %p609 = pneg %p174
        $region42: #{tpu_custom_call.1} parent=27 // pred_check_branch
          %611 = sbr.rel (%p609) target = $region44
        $region43: #{tpu_custom_call.1} parent=27 // pred_region
          %s612 = sand.u32 %s43, 1
          %s613 = scalar_lea.sflag [#allocation11], %s612
          %s614 = sand.u32 %s164, 1
          %s615 = smul.addr %s614, 32
          %s616 = scalar_lea.vmem [#allocation12], %s615
          %s618 = ssub.s32 512, 512
          %619 = vsyncadd %s613, %s618
          %s620 = smul.addr %s51, 8
          %s621 = smul.addr %s620, 64
          %s622 = scalar_lea.hbm %s4, %s621
          %s623 = sshll.u32 %s616, 4
          %s624 = int_to_ptr.vmem [resolvable:$true] %s623
          %629 = dma.hbm_to_vmem [thread:$0]  %s622, 512, %s624, %s613, 64, 64, 4
        $region44: #{tpu_custom_call.1} parent=27 // pred_fallthru
          _
        // Predicated region
        $region45: #{tpu_custom_call.1} parent=27 // pred_check
          %p630 = pneg %p200
        $region46: #{tpu_custom_call.1} parent=27 // pred_check_branch
          %632 = sbr.rel (%p630) target = $region48
        $region47: #{tpu_custom_call.1} parent=27 // pred_region
          %p633 = scmp.lt.s32.totalorder %s51, 1
          %s634 = scalar_select %p633, %s51, 1
          %s635 = scalar_lea.vmem %s5, %s634
        $region48: #{tpu_custom_call.1} parent=27 // pred_fallthru
          _
        // Predicated region
        $region49: #{tpu_custom_call.1} parent=27 // pred_check
          %p636 = pneg %p226
        $region50: #{tpu_custom_call.1} parent=27 // pred_check_branch
          %638 = sbr.rel (%p636) target = $region52
        $region51: #{tpu_custom_call.1} parent=27 // pred_region
          %p639 = scmp.lt.s32.totalorder %s51, 1
          %s640 = scalar_select %p639, %s51, 1
          %s641 = scalar_lea.vmem %s6, %s640
        $region52: #{tpu_custom_call.1} parent=27 // pred_fallthru
          _
        // Predicated region
        $region53: #{tpu_custom_call.1} parent=27 // pred_check
          %p642 = pneg %p252
        $region54: #{tpu_custom_call.1} parent=27 // pred_check_branch
          %644 = sbr.rel (%p642) target = $region56
        $region55: #{tpu_custom_call.1} parent=27 // pred_region
          %s645 = sand.u32 %s43, 1
          %s646 = scalar_lea.sflag [#allocation14], %s645
          %s647 = sand.u32 %s242, 1
          %s648 = smul.addr %s647, 32
          %s649 = scalar_lea.vmem [#allocation13], %s648
          %s651 = ssub.s32 512, 512
          %652 = vsyncadd %s646, %s651
          %s653 = smul.addr %s51, 8
          %s654 = smul.addr %s653, 64
          %s655 = scalar_lea.hbm %s7, %s654
          %s656 = sshll.u32 %s649, 4
          %s657 = int_to_ptr.vmem [resolvable:$true] %s656
          %662 = dma.hbm_to_vmem [thread:$0]  %s655, 512, %s657, %s646, 64, 64, 4
        $region56: #{tpu_custom_call.1} parent=27 // pred_fallthru
          _
        // Predicated region
        $region57: #{tpu_custom_call.1} parent=27 // pred_check
          %p663 = pneg %p278
        $region58: #{tpu_custom_call.1} parent=27 // pred_check_branch
          %665 = sbr.rel (%p663) target = $region60
        $region59: #{tpu_custom_call.1} parent=27 // pred_region
          %p666 = scmp.lt.s32.totalorder %s51, 1
          %s667 = scalar_select %p666, %s51, 1
          %s668 = scalar_lea.vmem %s8, %s667
        $region60: #{tpu_custom_call.1} parent=27 // pred_fallthru
          _
        // Predicated region
        $region61: #{tpu_custom_call.1} parent=27 // pred_check
          %p669 = pneg %p304
        $region62: #{tpu_custom_call.1} parent=27 // pred_check_branch
          %671 = sbr.rel (%p669) target = $region64
        $region63: #{tpu_custom_call.1} parent=27 // pred_region
          %p672 = scmp.lt.s32.totalorder %s51, 1
          %s673 = scalar_select %p672, %s51, 1
          %s674 = smul.addr %s673, 2
          %s675 = scalar_lea.vmem %s9, %s674
        $region64: #{tpu_custom_call.1} parent=27 // pred_fallthru
          _
        // Predicated region
        $region65: #{tpu_custom_call.1} parent=27 // pred_check
          %p676 = pneg %p330
        $region66: #{tpu_custom_call.1} parent=27 // pred_check_branch
          %678 = sbr.rel (%p676) target = $region68
        $region67: #{tpu_custom_call.1} parent=27 // pred_region
          %s679 = sand.u32 %s43, 1
          %s680 = scalar_lea.sflag [#allocation14], %s679
          %s681 = sand.u32 %s320, 1
          %s682 = smul.addr %s681, 32
          %s683 = scalar_lea.vmem [#allocation15], %s682
          %s685 = ssub.s32 512, 512
          %686 = vsyncadd %s680, %s685
          %s687 = smul.addr %s51, 8
          %s688 = smul.addr %s687, 64
          %s689 = scalar_lea.hbm %s10, %s688
          %s690 = sshll.u32 %s683, 4
          %s691 = int_to_ptr.vmem [resolvable:$true] %s690
          %696 = dma.hbm_to_vmem [thread:$0]  %s689, 512, %s691, %s680, 64, 64, 4
        $region68: #{tpu_custom_call.1} parent=27 // pred_fallthru
          _
        // Predicated region
        $region69: #{tpu_custom_call.1} parent=27 // pred_check
          %p697 = pneg %p356
        $region70: #{tpu_custom_call.1} parent=27 // pred_check_branch
          %699 = sbr.rel (%p697) target = $region72
        $region71: #{tpu_custom_call.1} parent=27 // pred_region
          %p700 = scmp.lt.s32.totalorder %s51, 1
          %s701 = scalar_select %p700, %s51, 1
          %s702 = scalar_lea.vmem %s11, %s701
        $region72: #{tpu_custom_call.1} parent=27 // pred_fallthru
          _
        // Predicated region
        $region73: #{tpu_custom_call.1} parent=27 // pred_check
          %p703 = pneg %p382
        $region74: #{tpu_custom_call.1} parent=27 // pred_check_branch
          %705 = sbr.rel (%p703) target = $region76
        $region75: #{tpu_custom_call.1} parent=27 // pred_region
          %s706 = sand.u32 %s372, 1
          %s707 = scalar_lea.sflag [#allocation17], %s706
          %s708 = sand.u32 %s372, 1
          %s709 = smul.addr %s708, 32
          %s710 = scalar_lea.vmem [#allocation16], %s709
          %s712 = ssub.s32 512, 512
          %713 = vsyncadd %s707, %s712
          %s714 = smul.addr %s51, 8
          %s715 = smul.addr %s714, 64
          %s716 = scalar_lea.hbm %s12, %s715
          %s717 = sshll.u32 %s710, 4
          %s718 = int_to_ptr.vmem [resolvable:$true] %s717
          %723 = dma.hbm_to_vmem [thread:$0]  %s716, 512, %s718, %s707, 64, 64, 4
        $region76: #{tpu_custom_call.1} parent=27 // pred_fallthru
          _
        // Predicated region
        $region77: #{tpu_custom_call.1} parent=27 // pred_check
          %p724 = pneg %p408
        $region78: #{tpu_custom_call.1} parent=27 // pred_check_branch
          %726 = sbr.rel (%p724) target = $region80
        $region79: #{tpu_custom_call.1} parent=27 // pred_region
          %p727 = scmp.lt.s32.totalorder %s51, 1
          %s728 = scalar_select %p727, %s51, 1
          %s729 = scalar_lea.vmem %s13, %s728
        $region80: #{tpu_custom_call.1} parent=27 // pred_fallthru
          _
        // Predicated region
        $region81: #{tpu_custom_call.1} parent=27 // pred_check
          %p730 = pneg %p434
        $region82: #{tpu_custom_call.1} parent=27 // pred_check_branch
          %732 = sbr.rel (%p730) target = $region84
        $region83: #{tpu_custom_call.1} parent=27 // pred_region
          %p733 = scmp.lt.s32.totalorder %s51, 1
          %s734 = scalar_select %p733, %s51, 1
          %s735 = smul.addr %s734, 2
          %s736 = scalar_lea.vmem %s14, %s735
        $region84: #{tpu_custom_call.1} parent=27 // pred_fallthru
          _
      $region28: #{tpu_custom_call.1} parent=5 // pred_fallthru
        _
      %p737 = scmp.le.s32.totalorder 1, %s43
      %p738 = scmp.lt.s32.totalorder %s43, 5
      %p739 = pnand %p737, %p738
      %p740 = pneg %p739
      // Predicated region
      $region85: #{tpu_custom_call.1} parent=5 // pred_check
        _
      $region86: #{tpu_custom_call.1} parent=5 // pred_check_branch
        %742 = sbr.rel (%p739) target = $region88
      $region87: #{tpu_custom_call.1} parent=5 // pred_region
        %s743 = ssub.s32 %s43, 1
        %s744 = sand.u32 %s68, 1
        %s745 = scalar_lea.sflag [#allocation5], %s744
        %s746 = sand.u32 %s68, 1
        %s747 = smul.addr %s746, 16
        %s748 = scalar_lea.vmem [#allocation4], %s747
        // Predicated region
        $region89: #{tpu_custom_call.1} parent=87 // pred_check
          %p749 = pneg %p81
        $region90: #{tpu_custom_call.1} parent=87 // pred_check_branch
          %751 = sbr.rel (%p749) target = $region92
        $region91: #{tpu_custom_call.1} parent=87 // pred_region
          %752 = dma.done %s745, 256
        $region92: #{tpu_custom_call.1} parent=87 // pred_fallthru
          _
        %s753 = sand.u32 %s48, 1
        %s754 = scalar_lea.sflag [#allocation8], %s753
        %s755 = sand.u32 %s94, 1
        %s756 = smul.addr %s755, 16
        %s757 = scalar_lea.vmem [#allocation7], %s756
        // Predicated region
        $region93: #{tpu_custom_call.1} parent=87 // pred_check
          %p758 = pneg %p107
        $region94: #{tpu_custom_call.1} parent=87 // pred_check_branch
          %760 = sbr.rel (%p758) target = $region96
        $region95: #{tpu_custom_call.1} parent=87 // pred_region
          %761 = dma.done %s754, 256
        $region96: #{tpu_custom_call.1} parent=87 // pred_fallthru
          _
        // Predicated region
        $region97: #{tpu_custom_call.1} parent=87 // pred_check
          %p762 = pneg %p128
        $region98: #{tpu_custom_call.1} parent=87 // pred_check_branch
          %764 = sbr.rel (%p762) target = $region100
        $region99: #{tpu_custom_call.1} parent=87 // pred_region
          %765 = dma.done [#allocation8], 256
        $region100: #{tpu_custom_call.1} parent=87 // pred_fallthru
          _
        %s766 = sand.u32 %s48, 1
        %s767 = scalar_lea.sflag [#allocation11], %s766
        %s768 = sand.u32 %s141, 1
        %s769 = smul.addr %s768, 32
        %s770 = scalar_lea.vmem [#allocation10], %s769
        // Predicated region
        $region101: #{tpu_custom_call.1} parent=87 // pred_check
          %p771 = pneg %p154
        $region102: #{tpu_custom_call.1} parent=87 // pred_check_branch
          %773 = sbr.rel (%p771) target = $region104
        $region103: #{tpu_custom_call.1} parent=87 // pred_region
          %774 = dma.done %s767, 512
        $region104: #{tpu_custom_call.1} parent=87 // pred_fallthru
          _
        %s775 = sand.u32 %s48, 1
        %s776 = scalar_lea.sflag [#allocation11], %s775
        %s777 = sand.u32 %s167, 1
        %s778 = smul.addr %s777, 32
        %s779 = scalar_lea.vmem [#allocation12], %s778
        // Predicated region
        $region105: #{tpu_custom_call.1} parent=87 // pred_check
          %p780 = pneg %p180
        $region106: #{tpu_custom_call.1} parent=87 // pred_check_branch
          %782 = sbr.rel (%p780) target = $region108
        $region107: #{tpu_custom_call.1} parent=87 // pred_region
          %783 = dma.done %s776, 512
        $region108: #{tpu_custom_call.1} parent=87 // pred_fallthru
          _
        %s784 = sand.u32 %s48, 1
        %s785 = scalar_lea.sflag [#allocation14], %s784
        %s786 = sand.u32 %s245, 1
        %s787 = smul.addr %s786, 32
        %s788 = scalar_lea.vmem [#allocation13], %s787
        // Predicated region
        $region109: #{tpu_custom_call.1} parent=87 // pred_check
          %p789 = pneg %p258
        $region110: #{tpu_custom_call.1} parent=87 // pred_check_branch
          %791 = sbr.rel (%p789) target = $region112
        $region111: #{tpu_custom_call.1} parent=87 // pred_region
          %792 = dma.done %s785, 512
        $region112: #{tpu_custom_call.1} parent=87 // pred_fallthru
          _
        %s793 = sand.u32 %s48, 1
        %s794 = scalar_lea.sflag [#allocation14], %s793
        %s795 = sand.u32 %s323, 1
        %s796 = smul.addr %s795, 32
        %s797 = scalar_lea.vmem [#allocation15], %s796
        // Predicated region
        $region113: #{tpu_custom_call.1} parent=87 // pred_check
          %p798 = pneg %p336
        $region114: #{tpu_custom_call.1} parent=87 // pred_check_branch
          %800 = sbr.rel (%p798) target = $region116
        $region115: #{tpu_custom_call.1} parent=87 // pred_region
          %801 = dma.done %s794, 512
        $region116: #{tpu_custom_call.1} parent=87 // pred_fallthru
          _
        %s802 = sand.u32 %s375, 1
        %s803 = scalar_lea.sflag [#allocation17], %s802
        %s804 = sand.u32 %s375, 1
        %s805 = smul.addr %s804, 32
        %s806 = scalar_lea.vmem [#allocation16], %s805
        // Predicated region
        $region117: #{tpu_custom_call.1} parent=87 // pred_check
          %p807 = pneg %p388
        $region118: #{tpu_custom_call.1} parent=87 // pred_check_branch
          %809 = sbr.rel (%p807) target = $region120
        $region119: #{tpu_custom_call.1} parent=87 // pred_region
          %810 = dma.done %s803, 512
        $region120: #{tpu_custom_call.1} parent=87 // pred_fallthru
          _
        %s811 = sand.u32 %s68, 1
        %s812 = scalar_lea.sflag [#allocation5], %s811
        %s813 = sand.u32 %s68, 1
        %s814 = smul.addr %s813, 16
        %s815 = scalar_lea.vmem [#allocation4], %s814
        %p816 = pneg %p81
        %p817 = pneg %p78
        %s818 = sand.u32 %s48, 1
        %s819 = scalar_lea.sflag [#allocation8], %s818
        %s820 = sand.u32 %s94, 1
        %s821 = smul.addr %s820, 16
        %s822 = scalar_lea.vmem [#allocation7], %s821
        %p823 = pneg %p107
        %p824 = pneg %p104
        %p825 = pneg %p128
        %p826 = pneg %p125
        %s827 = sand.u32 %s48, 1
        %s828 = scalar_lea.sflag [#allocation11], %s827
        %s829 = sand.u32 %s141, 1
        %s830 = smul.addr %s829, 32
        %s831 = scalar_lea.vmem [#allocation10], %s830
        %p832 = pneg %p154
        %p833 = pneg %p151
        %s834 = sand.u32 %s48, 1
        %s835 = scalar_lea.sflag [#allocation11], %s834
        %s836 = sand.u32 %s167, 1
        %s837 = smul.addr %s836, 32
        %s838 = scalar_lea.vmem [#allocation12], %s837
        %p839 = pneg %p180
        %p840 = pneg %p177
        %p841 = scmp.lt.s32.totalorder %s53, 1
        %s842 = scalar_select %p841, %s53, 1
        %s843 = scalar_lea.vmem %s5, %s842
        %p844 = pneg %p206
        %p845 = pneg %p203
        %p846 = scmp.lt.s32.totalorder %s53, 1
        %s847 = scalar_select %p846, %s53, 1
        %s848 = scalar_lea.vmem %s6, %s847
        %p849 = pneg %p232
        %p850 = pneg %p229
        %s851 = sand.u32 %s48, 1
        %s852 = scalar_lea.sflag [#allocation14], %s851
        %s853 = sand.u32 %s245, 1
        %s854 = smul.addr %s853, 32
        %s855 = scalar_lea.vmem [#allocation13], %s854
        %p856 = pneg %p258
        %p857 = pneg %p255
        %p858 = scmp.lt.s32.totalorder %s53, 1
        %s859 = scalar_select %p858, %s53, 1
        %s860 = scalar_lea.vmem %s8, %s859
        %p861 = pneg %p284
        %p862 = pneg %p281
        %p863 = scmp.lt.s32.totalorder %s53, 1
        %s864 = scalar_select %p863, %s53, 1
        %s865 = smul.addr %s864, 2
        %s866 = scalar_lea.vmem %s9, %s865
        %p867 = pneg %p310
        %p868 = pneg %p307
        %s869 = sand.u32 %s48, 1
        %s870 = scalar_lea.sflag [#allocation14], %s869
        %s871 = sand.u32 %s323, 1
        %s872 = smul.addr %s871, 32
        %s873 = scalar_lea.vmem [#allocation15], %s872
        %p874 = pneg %p336
        %p875 = pneg %p333
        %p876 = scmp.lt.s32.totalorder %s53, 1
        %s877 = scalar_select %p876, %s53, 1
        %s878 = scalar_lea.vmem %s11, %s877
        %p879 = pneg %p362
        %p880 = pneg %p359
        %s881 = sand.u32 %s375, 1
        %s882 = scalar_lea.sflag [#allocation17], %s881
        %s883 = sand.u32 %s375, 1
        %s884 = smul.addr %s883, 32
        %s885 = scalar_lea.vmem [#allocation16], %s884
        %p886 = pneg %p388
        %p887 = pneg %p385
        %p888 = scmp.lt.s32.totalorder %s53, 1
        %s889 = scalar_select %p888, %s53, 1
        %s890 = scalar_lea.vmem %s13, %s889
        %p891 = pneg %p414
        %p892 = pneg %p411
        %p893 = scmp.lt.s32.totalorder %s53, 1
        %s894 = scalar_select %p893, %s53, 1
        %s895 = smul.addr %s894, 2
        %s896 = scalar_lea.vmem %s14, %s895
        %p897 = pneg %p440
        %p898 = pneg %p437
        %p899 = pneg %p461
        %p900 = pneg %p458
        %p901 = pneg %p482
        %p902 = pneg %p479
        %p903 = pneg %p508
        %p904 = pneg %p505
        %s905 = sand.u32 %s495, 1
        %s906 = scalar_lea.sflag [#allocation6], %s905
        %s907 = sand.u32 %s495, 1
        %s908 = scalar_lea.vmem [#allocation18], %s907
        %p909 = scmp.lt.s32.totalorder %s53, 1
        %s910 = scalar_select %p909, %s53, 1
        %s911 = scalar_lea.vmem %s5, %s910
        %p912 = scmp.lt.s32.totalorder %s53, 1
        %s913 = scalar_select %p912, %s53, 1
        %s914 = scalar_lea.vmem %s6, %s913
        %p915 = scmp.lt.s32.totalorder %s53, 1
        %s916 = scalar_select %p915, %s53, 1
        %s917 = scalar_lea.vmem %s8, %s916
        %p918 = scmp.lt.s32.totalorder %s53, 1
        %s919 = scalar_select %p918, %s53, 1
        %s920 = smul.addr %s919, 2
        %s921 = scalar_lea.vmem %s9, %s920
        %p922 = scmp.lt.s32.totalorder %s53, 1
        %s923 = scalar_select %p922, %s53, 1
        %s924 = scalar_lea.vmem %s11, %s923
        %p925 = scmp.lt.s32.totalorder %s53, 1
        %s926 = scalar_select %p925, %s53, 1
        %s927 = scalar_lea.vmem %s13, %s926
        %p928 = scmp.lt.s32.totalorder %s53, 1
        %s929 = scalar_select %p928, %s53, 1
        %s930 = smul.addr %s929, 2
        %s931 = scalar_lea.vmem %s14, %s930
        %p933 = scmp.eq.s32.totalorder %s53, 0
        // Predicated region
        $region121: #{tpu_custom_call.1} parent=87 // pred_check
          %p934 = pneg %p933
        $region122: #{tpu_custom_call.1} parent=87 // pred_check_branch
          %936 = sbr.rel (%p934) target = $region124
        $region123: #{tpu_custom_call.1} parent=87 // pred_region
          %v937 = vld [vmem:[%s757] sm:$0xff]
          %v938 = vld [vmem:[%s757 + $0x8] sm:$0xff]
          %vm939 = vcmask 523264
          %940 = vst.msk [vmem:[#allocation2] sm:$0xff] %vm939, %v937
          %941 = vst.msk [vmem:[#allocation2 + $0x8] sm:$0xff] %vm939, %v938
        $region124: #{tpu_custom_call.1} parent=87 // pred_fallthru
          _
        %v942 = vld [vmem:[%s748] sm:$0xff]
        %v943 = vld [vmem:[%s748 + $0x8] sm:$0xff]
        %v944 = vld [vmem:[#allocation2] sm:$0xff]
        %v945 = vld [vmem:[#allocation2 + $0x8] sm:$0xff]
        %v946 = vpack.c.bf16 %v943, %v942
        %v947 = vpack.c.bf16 %v945, %v944
        %v948 = vld [vmem:[%s770] sm:$0xf]
        %v949 = vld [vmem:[%s770 + $0x4] sm:$0xf]
        %v950 = vld [vmem:[%s770 + $0x8] sm:$0xf]
        %v951 = vld [vmem:[%s770 + $0xc] sm:$0xf]
        %v952 = vld [vmem:[%s770 + $0x10] sm:$0xf]
        %v953 = vld [vmem:[%s770 + $0x14] sm:$0xf]
        %v954 = vld [vmem:[%s770 + $0x18] sm:$0xf]
        %v955 = vld [vmem:[%s770 + $0x1c] sm:$0xf]
        %v956 = vld [vmem:[%s911] sm:$0x1]
        %v958 = vlaneseq
        %v959 = vshrl.u32 %v958, 7
        %v960 = vsub.s32 0, %v959
        %v961 = vrot.slane %v956, %v960
        %v971 = vunpack.c.l.b16 %v948
        %v972 = vunpack.c.l.b16 %v949
        %v973 = vunpack.c.l.b16 %v950
        %v974 = vunpack.c.l.b16 %v951
        %v975 = vunpack.c.l.b16 %v952
        %v976 = vunpack.c.l.b16 %v953
        %v977 = vunpack.c.l.b16 %v954
        %v978 = vunpack.c.l.b16 %v955
        %v979 = vpack.c.b16 %v972, %v971
        %v980 = vpack.c.b16 %v974, %v973
        %v981 = vpack.c.b16 %v976, %v975
        %v982 = vpack.c.b16 %v978, %v977
        %vm987 = vcmask 523264
        %v989 = vsel %vm987, %v946, 0
        %991 = vmatprep.subr.bf16.mxu0 0
        %992 = vmatpush1.bf16.msra.mxu0 0
        %993 = vmatprep.subr.bf16.mxu0 0
        %994 = vmatpush1.bf16.msra.mxu0 0
        %995 = vmatprep.subr.bf16.mxu0 0
        %996 = vmatpush1.bf16.msra.mxu0 0
        %997 = vmatprep.subr.bf16.mxu0 0
        %998 = vmatpush1.bf16.msra.mxu0 0
        %999 = vmatprep.subr.bf16.mxu0 0
        %1000 = vmatpush1.bf16.msra.mxu0 %v982
        %1001 = vmatprep.subr.bf16.mxu0 0
        %1002 = vmatpush1.bf16.msra.mxu0 %v981
        %1003 = vmatprep.subr.bf16.mxu0 0
        %1004 = vmatpush1.bf16.msra.mxu0 %v980
        %1005 = vmatprep.subr.bf16.mxu0 0
        %1006 = vmatpush1.bf16.msra.mxu0 %v979
        %1007 = vmatprep.subr.bf16.mxu0 0
        %1008 = vmatpush2.bf16.msra.mxu0 0
        %1009 = vmatprep.subr.bf16.mxu0 0
        %1010 = vmatpush2.bf16.msra.mxu0 0
        %1011 = vmatprep.subr.bf16.mxu0 0
        %1012 = vmatpush2.bf16.msra.mxu0 0
        %1013 = vmatprep.subr.bf16.mxu0 0
        %1014 = vmatpush2.bf16.msra.mxu0 0
        %1015 = vmatprep.subr.bf16.mxu0 0
        %1016 = vmatpush2.bf16.msra.mxu0 0
        %1017 = vmatprep.subr.bf16.mxu0 0
        %1018 = vmatpush2.bf16.msra.mxu0 0
        %1019 = vmatprep.subr.bf16.mxu0 0
        %1020 = vmatpush2.bf16.msra.mxu0 0
        %1021 = vmatprep.subr.bf16.mxu0 0
        %1022 = vmatpush2.bf16.msra.mxu0 0
        %1023 = vmatprep.mubr.bf16.mxu0 0
        %1024 = vmatmul.mubr.bf16.gmra.mxu0 %v989
        %v1025 = vpop.f32.mrf.mxu0
        %v1026 = vadd.f32 %v961, %v1025
        %v1027 = vpop.f32.mrf.mxu0
        %v1028 = vpop.f32.mrf.mxu0
        %v1029 = vadd.f32 %v961, %v1028
        %v1030 = vpop.f32.mrf.mxu0
        %1031 = vdwg.mxu0
        %v1032 = vld [vmem:[%s779] sm:$0xf]
        %v1033 = vld [vmem:[%s779 + $0x4] sm:$0xf]
        %v1034 = vld [vmem:[%s779 + $0x8] sm:$0xf]
        %v1035 = vld [vmem:[%s779 + $0xc] sm:$0xf]
        %v1036 = vld [vmem:[%s779 + $0x10] sm:$0xf]
        %v1037 = vld [vmem:[%s779 + $0x14] sm:$0xf]
        %v1038 = vld [vmem:[%s779 + $0x18] sm:$0xf]
        %v1039 = vld [vmem:[%s779 + $0x1c] sm:$0xf]
        %v1040 = vld [vmem:[%s914] sm:$0x1]
        %v1042 = vlaneseq
        %v1043 = vshrl.u32 %v1042, 7
        %v1044 = vsub.s32 0, %v1043
        %v1045 = vrot.slane %v1040, %v1044
        %v1055 = vunpack.c.l.b16 %v1032
        %v1056 = vunpack.c.l.b16 %v1033
        %v1057 = vunpack.c.l.b16 %v1034
        %v1058 = vunpack.c.l.b16 %v1035
        %v1059 = vunpack.c.l.b16 %v1036
        %v1060 = vunpack.c.l.b16 %v1037
        %v1061 = vunpack.c.l.b16 %v1038
        %v1062 = vunpack.c.l.b16 %v1039
        %v1063 = vpack.c.b16 %v1056, %v1055
        %v1064 = vpack.c.b16 %v1058, %v1057
        %v1065 = vpack.c.b16 %v1060, %v1059
        %v1066 = vpack.c.b16 %v1062, %v1061
        %v1072 = vsel %vm987, %v947, 0
        %1074 = vmatprep.subr.bf16.mxu0 0
        %1075 = vmatpush1.bf16.msra.mxu0 0
        %1076 = vmatprep.subr.bf16.mxu0 0
        %1077 = vmatpush1.bf16.msra.mxu0 0
        %1078 = vmatprep.subr.bf16.mxu0 0
        %1079 = vmatpush1.bf16.msra.mxu0 0
        %1080 = vmatprep.subr.bf16.mxu0 0
        %1081 = vmatpush1.bf16.msra.mxu0 0
        %1082 = vmatprep.subr.bf16.mxu0 0
        %1083 = vmatpush1.bf16.msra.mxu0 %v1066
        %1084 = vmatprep.subr.bf16.mxu0 0
        %1085 = vmatpush1.bf16.msra.mxu0 %v1065
        %1086 = vmatprep.subr.bf16.mxu0 0
        %1087 = vmatpush1.bf16.msra.mxu0 %v1064
        %1088 = vmatprep.subr.bf16.mxu0 0
        %1089 = vmatpush1.bf16.msra.mxu0 %v1063
        %1090 = vmatprep.subr.bf16.mxu0 0
        %1091 = vmatpush2.bf16.msra.mxu0 0
        %1092 = vmatprep.subr.bf16.mxu0 0
        %1093 = vmatpush2.bf16.msra.mxu0 0
        %1094 = vmatprep.subr.bf16.mxu0 0
        %1095 = vmatpush2.bf16.msra.mxu0 0
        %1096 = vmatprep.subr.bf16.mxu0 0
        %1097 = vmatpush2.bf16.msra.mxu0 0
        %1098 = vmatprep.subr.bf16.mxu0 0
        %1099 = vmatpush2.bf16.msra.mxu0 0
        %1100 = vmatprep.subr.bf16.mxu0 0
        %1101 = vmatpush2.bf16.msra.mxu0 0
        %1102 = vmatprep.subr.bf16.mxu0 0
        %1103 = vmatpush2.bf16.msra.mxu0 0
        %1104 = vmatprep.subr.bf16.mxu0 0
        %1105 = vmatpush2.bf16.msra.mxu0 0
        %1106 = vmatprep.mubr.bf16.mxu0 0
        %1107 = vmatmul.mubr.bf16.gmra.mxu0 %v1072
        %v1108 = vpop.f32.mrf.mxu0
        %v1109 = vadd.f32 %v1045, %v1108
        %v1110 = vpop.f32.mrf.mxu0
        %v1111 = vpop.f32.mrf.mxu0
        %v1112 = vadd.f32 %v1045, %v1111
        %v1113 = vpop.f32.mrf.mxu0
        %1114 = vdwg.mxu0
        %1117 = vrot.lane.b32.xlu0 %v1026, 96
        %v1118 = vpop.permute.xlu0 %1117
        %1119 = vrot.lane.b32.xlu0 %v1029, 96
        %v1120 = vpop.permute.xlu0 %1119
        %v1123 = vpack.c.bf16 %v1029, %v1026
        %v1124 = vpack.c.bf16 %v1120, %v1118
        %1127 = vrot.lane.b32.xlu0 %v1109, 96
        %v1128 = vpop.permute.xlu0 %1127
        %1129 = vrot.lane.b32.xlu0 %v1112, 96
        %v1130 = vpop.permute.xlu0 %1129
        %v1133 = vpack.c.bf16 %v1112, %v1109
        %v1134 = vpack.c.bf16 %v1130, %v1128
        %v1135 = vld [vmem:[#allocation9] sm:$0xff]
        %v1136 = vld [vmem:[#allocation9 + $0x8] sm:$0xff]
        %vm1137 = vcmask 261120
        %v1139 = vsel %vm1137, %v1123, 0
        %v1142 = vsel %vm1137, %v1133, 0
        %1144 = vmatprep.subr.bf16.mxu0 0
        %1145 = vmatpush1.bf16.xpose.msra.mxu0 0
        %1146 = vmatprep.subr.bf16.mxu0 0
        %1147 = vmatpush1.bf16.xpose.msra.mxu0 0
        %1148 = vmatprep.subr.bf16.mxu0 0
        %1149 = vmatpush1.bf16.xpose.msra.mxu0 0
        %1150 = vmatprep.subr.bf16.mxu0 0
        %1151 = vmatpush1.bf16.xpose.msra.mxu0 0
        %1152 = vmatprep.subr.bf16.mxu0 0
        %1153 = vmatpush1.bf16.xpose.msra.mxu0 0
        %1154 = vmatprep.subr.bf16.mxu0 0
        %1155 = vmatpush1.bf16.xpose.msra.mxu0 0
        %1156 = vmatprep.subr.bf16.mxu0 0
        %1157 = vmatpush1.bf16.xpose.msra.mxu0 0
        %1158 = vmatprep.subr.bf16.mxu0 0
        %1159 = vmatpush1.bf16.xpose.msra.mxu0 %v1142
        %1160 = vmatprep.subr.bf16.mxu0 0
        %1161 = vmatpush2.bf16.xpose.msra.mxu0 0
        %1162 = vmatprep.subr.bf16.mxu0 0
        %1163 = vmatpush2.bf16.xpose.msra.mxu0 0
        %1164 = vmatprep.subr.bf16.mxu0 0
        %1165 = vmatpush2.bf16.xpose.msra.mxu0 0
        %1166 = vmatprep.subr.bf16.mxu0 0
        %1167 = vmatpush2.bf16.xpose.msra.mxu0 0
        %1168 = vmatprep.subr.bf16.mxu0 0
        %1169 = vmatpush2.bf16.xpose.msra.mxu0 0
        %1170 = vmatprep.subr.bf16.mxu0 0
        %1171 = vmatpush2.bf16.xpose.msra.mxu0 0
        %1172 = vmatprep.subr.bf16.mxu0 0
        %1173 = vmatpush2.bf16.xpose.msra.mxu0 0
        %1174 = vmatprep.subr.bf16.mxu0 0
        %1175 = vmatpush2.bf16.xpose.msra.mxu0 0
        %1176 = vmatprep.mubr.bf16.mxu0 0
        %1177 = vmatmul.mubr.bf16.gmra.mxu0 %v1139
        %v1178 = vpop.f32.mrf.mxu0
        %v1179 = vadd.f32 %v1135, %v1178
        %v1180 = vpop.f32.mrf.mxu0
        %v1181 = vpop.f32.mrf.mxu0
        %v1182 = vadd.f32 %v1136, %v1181
        %v1183 = vpop.f32.mrf.mxu0
        %1184 = vdwg.mxu0
        %v1186 = vsel %vm1137, %v1124, 0
        %v1189 = vsel %vm1137, %v1134, 0
        %1191 = vmatprep.subr.bf16.mxu0 0
        %1192 = vmatpush1.bf16.xpose.msra.mxu0 0
        %1193 = vmatprep.subr.bf16.mxu0 0
        %1194 = vmatpush1.bf16.xpose.msra.mxu0 0
        %1195 = vmatprep.subr.bf16.mxu0 0
        %1196 = vmatpush1.bf16.xpose.msra.mxu0 0
        %1197 = vmatprep.subr.bf16.mxu0 0
        %1198 = vmatpush1.bf16.xpose.msra.mxu0 0
        %1199 = vmatprep.subr.bf16.mxu0 0
        %1200 = vmatpush1.bf16.xpose.msra.mxu0 0
        %1201 = vmatprep.subr.bf16.mxu0 0
        %1202 = vmatpush1.bf16.xpose.msra.mxu0 0
        %1203 = vmatprep.subr.bf16.mxu0 0
        %1204 = vmatpush1.bf16.xpose.msra.mxu0 0
        %1205 = vmatprep.subr.bf16.mxu0 0
        %1206 = vmatpush1.bf16.xpose.msra.mxu0 %v1189
        %1207 = vmatprep.subr.bf16.mxu0 0
        %1208 = vmatpush2.bf16.xpose.msra.mxu0 0
        %1209 = vmatprep.subr.bf16.mxu0 0
        %1210 = vmatpush2.bf16.xpose.msra.mxu0 0
        %1211 = vmatprep.subr.bf16.mxu0 0
        %1212 = vmatpush2.bf16.xpose.msra.mxu0 0
        %1213 = vmatprep.subr.bf16.mxu0 0
        %1214 = vmatpush2.bf16.xpose.msra.mxu0 0
        %1215 = vmatprep.subr.bf16.mxu0 0
        %1216 = vmatpush2.bf16.xpose.msra.mxu0 0
        %1217 = vmatprep.subr.bf16.mxu0 0
        %1218 = vmatpush2.bf16.xpose.msra.mxu0 0
        %1219 = vmatprep.subr.bf16.mxu0 0
        %1220 = vmatpush2.bf16.xpose.msra.mxu0 0
        %1221 = vmatprep.subr.bf16.mxu0 0
        %1222 = vmatpush2.bf16.xpose.msra.mxu0 0
        %1223 = vmatprep.mubr.bf16.mxu0 0
        %1224 = vmatmul.mubr.bf16.gmra.mxu0 %v1186
        %v1225 = vpop.f32.mrf.mxu0
        %v1226 = vadd.f32 %v1135, %v1225
        %v1227 = vpop.f32.mrf.mxu0
        %v1228 = vpop.f32.mrf.mxu0
        %v1229 = vadd.f32 %v1136, %v1228
        %v1230 = vpop.f32.mrf.mxu0
        %1231 = vdwg.mxu0
        %vm1232 = vcmask 130048
        %v1233 = vsel %vm1232, %v1179, -inf
        %1234 = vmax.xlane.f32.xlu0 %v1233
        %v1235 = vpop.xlane.xlu0 %1234
        %v1236 = vsel %vm1232, %v1182, -inf
        %1237 = vmax.xlane.f32.xlu0 %v1236
        %v1238 = vpop.xlane.xlu0 %1237
        %v1239 = vsel %vm1232, %v1226, -inf
        %1240 = vmax.xlane.f32.xlu0 %v1239
        %v1241 = vpop.xlane.xlu0 %1240
        %v1242 = vsel %vm1232, %v1229, -inf
        %1243 = vmax.xlane.f32.xlu0 %v1242
        %v1244 = vpop.xlane.xlu0 %1243
        %v1245 = vsub.f32 %v1179, %v1235
        %v1246 = vsub.f32 %v1182, %v1238
        %v1247 = vsub.f32 %v1226, %v1241
        %v1248 = vsub.f32 %v1229, %v1244
        %v1249 = vmul.f32 %v1245, 1.442695
        %v1250 = vpow.pop %v1249
        %v1251 = vmul.f32 %v1246, 1.442695
        %v1252 = vpow.pop %v1251
        %v1253 = vmul.f32 %v1247, 1.442695
        %v1254 = vpow.pop %v1253
        %v1255 = vmul.f32 %v1248, 1.442695
        %v1256 = vpow.pop %v1255
        %v1257 = vsel %vm1232, %v1250, 0.0
        %1258 = vadd.xlane.f32.xlu0 %v1257
        %v1259 = vpop.xlane.xlu0 %1258
        %v1260 = vsel %vm1232, %v1252, 0.0
        %1261 = vadd.xlane.f32.xlu0 %v1260
        %v1262 = vpop.xlane.xlu0 %1261
        %v1263 = vsel %vm1232, %v1254, 0.0
        %1264 = vadd.xlane.f32.xlu0 %v1263
        %v1265 = vpop.xlane.xlu0 %1264
        %v1266 = vsel %vm1232, %v1256, 0.0
        %1267 = vadd.xlane.f32.xlu0 %v1266
        %v1268 = vpop.xlane.xlu0 %1267
        %v1269 = vrcp.pop %v1259
        %v1270 = vrcp.pop %v1262
        %v1271 = vrcp.pop %v1265
        %v1272 = vrcp.pop %v1268
        %v1273 = vmul.f32 %v1250, %v1269
        %v1274 = vmul.f32 %v1252, %v1270
        %v1275 = vmul.f32 %v1254, %v1271
        %v1276 = vmul.f32 %v1256, %v1272
        %v1277 = vpack.c.bf16 %v1274, %v1273
        %v1278 = vpack.c.bf16 %v1276, %v1275
        %1280 = vrot.lane.b32.xlu0 %v1133, 64
        %v1281 = vpop.permute.xlu0 %1280
        %v1284 = vsel %vm1232, %v1277, 0
        %1286 = vmatprep.subr.bf16.mxu0 0
        %1287 = vmatpush1.bf16.msra.mxu0 0
        %1288 = vmatprep.subr.bf16.mxu0 0
        %1289 = vmatpush1.bf16.msra.mxu0 0
        %1290 = vmatprep.subr.bf16.mxu0 0
        %1291 = vmatpush1.bf16.msra.mxu0 0
        %1292 = vmatprep.subr.bf16.mxu0 0
        %1293 = vmatpush1.bf16.msra.mxu0 0
        %1294 = vmatprep.subr.bf16.mxu0 0
        %1295 = vmatpush1.bf16.msra.mxu0 0
        %1296 = vmatprep.subr.bf16.mxu0 0
        %1297 = vmatpush1.bf16.msra.mxu0 0
        %1298 = vmatprep.subr.bf16.mxu0 0
        %1299 = vmatpush1.bf16.msra.mxu0 0
        %1300 = vmatprep.subr.bf16.mxu0 0
        %1301 = vmatpush1.bf16.msra.mxu0 %v1281
        %1302 = vmatprep.subr.bf16.mxu0 0
        %1303 = vmatpush2.bf16.msra.mxu0 0
        %1304 = vmatprep.subr.bf16.mxu0 0
        %1305 = vmatpush2.bf16.msra.mxu0 0
        %1306 = vmatprep.subr.bf16.mxu0 0
        %1307 = vmatpush2.bf16.msra.mxu0 0
        %1308 = vmatprep.subr.bf16.mxu0 0
        %1309 = vmatpush2.bf16.msra.mxu0 0
        %1310 = vmatprep.subr.bf16.mxu0 0
        %1311 = vmatpush2.bf16.msra.mxu0 0
        %1312 = vmatprep.subr.bf16.mxu0 0
        %1313 = vmatpush2.bf16.msra.mxu0 0
        %1314 = vmatprep.subr.bf16.mxu0 0
        %1315 = vmatpush2.bf16.msra.mxu0 0
        %1316 = vmatprep.subr.bf16.mxu0 0
        %1317 = vmatpush2.bf16.msra.mxu0 0
        %1318 = vmatprep.mubr.bf16.mxu0 0
        %1319 = vmatmul.mubr.bf16.gmra.mxu0 %v1284
        %v1320 = vpop.f32.mrf.mxu0
        %v1321 = vadd.f32 0.0, %v1320
        %v1322 = vpop.f32.mrf.mxu0
        %v1323 = vpop.f32.mrf.mxu0
        %v1324 = vadd.f32 0.0, %v1323
        %v1325 = vpop.f32.mrf.mxu0
        %1326 = vdwg.mxu0
        %1328 = vrot.lane.b32.xlu0 %v1134, 64
        %v1329 = vpop.permute.xlu0 %1328
        %v1332 = vsel %vm1232, %v1278, 0
        %1334 = vmatprep.subr.bf16.mxu0 0
        %1335 = vmatpush1.bf16.msra.mxu0 0
        %1336 = vmatprep.subr.bf16.mxu0 0
        %1337 = vmatpush1.bf16.msra.mxu0 0
        %1338 = vmatprep.subr.bf16.mxu0 0
        %1339 = vmatpush1.bf16.msra.mxu0 0
        %1340 = vmatprep.subr.bf16.mxu0 0
        %1341 = vmatpush1.bf16.msra.mxu0 0
        %1342 = vmatprep.subr.bf16.mxu0 0
        %1343 = vmatpush1.bf16.msra.mxu0 0
        %1344 = vmatprep.subr.bf16.mxu0 0
        %1345 = vmatpush1.bf16.msra.mxu0 0
        %1346 = vmatprep.subr.bf16.mxu0 0
        %1347 = vmatpush1.bf16.msra.mxu0 0
        %1348 = vmatprep.subr.bf16.mxu0 0
        %1349 = vmatpush1.bf16.msra.mxu0 %v1329
        %1350 = vmatprep.subr.bf16.mxu0 0
        %1351 = vmatpush2.bf16.msra.mxu0 0
        %1352 = vmatprep.subr.bf16.mxu0 0
        %1353 = vmatpush2.bf16.msra.mxu0 0
        %1354 = vmatprep.subr.bf16.mxu0 0
        %1355 = vmatpush2.bf16.msra.mxu0 0
        %1356 = vmatprep.subr.bf16.mxu0 0
        %1357 = vmatpush2.bf16.msra.mxu0 0
        %1358 = vmatprep.subr.bf16.mxu0 0
        %1359 = vmatpush2.bf16.msra.mxu0 0
        %1360 = vmatprep.subr.bf16.mxu0 0
        %1361 = vmatpush2.bf16.msra.mxu0 0
        %1362 = vmatprep.subr.bf16.mxu0 0
        %1363 = vmatpush2.bf16.msra.mxu0 0
        %1364 = vmatprep.subr.bf16.mxu0 0
        %1365 = vmatpush2.bf16.msra.mxu0 0
        %1366 = vmatprep.mubr.bf16.mxu0 0
        %1367 = vmatmul.mubr.bf16.gmra.mxu0 %v1332
        %v1368 = vpop.f32.mrf.mxu0
        %v1369 = vadd.f32 0.0, %v1368
        %v1370 = vpop.f32.mrf.mxu0
        %v1371 = vpop.f32.mrf.mxu0
        %v1372 = vadd.f32 0.0, %v1371
        %v1373 = vpop.f32.mrf.mxu0
        %1374 = vdwg.mxu0
        %1377 = vrot.lane.b32.xlu0 %v1369, 32
        %v1378 = vpop.permute.xlu0 %1377
        %1379 = vrot.lane.b32.xlu0 %v1372, 32
        %v1380 = vpop.permute.xlu0 %1379
        %v1383 = vsel %vm1137, %v1321, %v1378
        %v1384 = vsel %vm1137, %v1324, %v1380
        %v1385 = vpack.c.bf16 %v1384, %v1383
        %v1386 = vld [vmem:[%s788] sm:$0xf]
        %v1387 = vld [vmem:[%s788 + $0x4] sm:$0xf]
        %v1388 = vld [vmem:[%s788 + $0x8] sm:$0xf]
        %v1389 = vld [vmem:[%s788 + $0xc] sm:$0xf]
        %v1390 = vld [vmem:[%s788 + $0x10] sm:$0xf]
        %v1391 = vld [vmem:[%s788 + $0x14] sm:$0xf]
        %v1392 = vld [vmem:[%s788 + $0x18] sm:$0xf]
        %v1393 = vld [vmem:[%s788 + $0x1c] sm:$0xf]
        %v1394 = vld [vmem:[%s917] sm:$0x1]
        %v1396 = vlaneseq
        %v1397 = vshrl.u32 %v1396, 7
        %v1398 = vsub.s32 0, %v1397
        %v1399 = vrot.slane %v1394, %v1398
        %v1409 = vunpack.c.l.b16 %v1386
        %v1410 = vunpack.c.l.b16 %v1387
        %v1411 = vunpack.c.l.b16 %v1388
        %v1412 = vunpack.c.l.b16 %v1389
        %v1413 = vunpack.c.l.b16 %v1390
        %v1414 = vunpack.c.l.b16 %v1391
        %v1415 = vunpack.c.l.b16 %v1392
        %v1416 = vunpack.c.l.b16 %v1393
        %v1417 = vpack.c.b16 %v1410, %v1409
        %v1418 = vpack.c.b16 %v1412, %v1411
        %v1419 = vpack.c.b16 %v1414, %v1413
        %v1420 = vpack.c.b16 %v1416, %v1415
        %v1426 = vsel %vm987, %v1385, 0
        %1428 = vmatprep.subr.bf16.mxu0 0
        %1429 = vmatpush1.bf16.msra.mxu0 0
        %1430 = vmatprep.subr.bf16.mxu0 0
        %1431 = vmatpush1.bf16.msra.mxu0 0
        %1432 = vmatprep.subr.bf16.mxu0 0
        %1433 = vmatpush1.bf16.msra.mxu0 0
        %1434 = vmatprep.subr.bf16.mxu0 0
        %1435 = vmatpush1.bf16.msra.mxu0 0
        %1436 = vmatprep.subr.bf16.mxu0 0
        %1437 = vmatpush1.bf16.msra.mxu0 %v1420
        %1438 = vmatprep.subr.bf16.mxu0 0
        %1439 = vmatpush1.bf16.msra.mxu0 %v1419
        %1440 = vmatprep.subr.bf16.mxu0 0
        %1441 = vmatpush1.bf16.msra.mxu0 %v1418
        %1442 = vmatprep.subr.bf16.mxu0 0
        %1443 = vmatpush1.bf16.msra.mxu0 %v1417
        %1444 = vmatprep.subr.bf16.mxu0 0
        %1445 = vmatpush2.bf16.msra.mxu0 0
        %1446 = vmatprep.subr.bf16.mxu0 0
        %1447 = vmatpush2.bf16.msra.mxu0 0
        %1448 = vmatprep.subr.bf16.mxu0 0
        %1449 = vmatpush2.bf16.msra.mxu0 0
        %1450 = vmatprep.subr.bf16.mxu0 0
        %1451 = vmatpush2.bf16.msra.mxu0 0
        %1452 = vmatprep.subr.bf16.mxu0 0
        %1453 = vmatpush2.bf16.msra.mxu0 0
        %1454 = vmatprep.subr.bf16.mxu0 0
        %1455 = vmatpush2.bf16.msra.mxu0 0
        %1456 = vmatprep.subr.bf16.mxu0 0
        %1457 = vmatpush2.bf16.msra.mxu0 0
        %1458 = vmatprep.subr.bf16.mxu0 0
        %1459 = vmatpush2.bf16.msra.mxu0 0
        %1460 = vmatprep.mubr.bf16.mxu0 0
        %1461 = vmatmul.mubr.bf16.gmra.mxu0 %v1426
        %v1462 = vpop.f32.mrf.mxu0
        %v1463 = vadd.f32 %v1399, %v1462
        %v1464 = vpop.f32.mrf.mxu0
        %v1465 = vpop.f32.mrf.mxu0
        %v1466 = vadd.f32 %v1399, %v1465
        %v1467 = vpop.f32.mrf.mxu0
        %1468 = vdwg.mxu0
        %v1469 = vadd.f32 %v942, %v1463
        %v1470 = vadd.f32 %v943, %v1466
        %v1471 = vld [vmem:[%s921] sm:$0x3]
        %v1472 = vsel %vm987, %v1469, 0.0
        %1473 = vadd.xlane.f32.xlu0 %v1472
        %v1474 = vpop.xlane.xlu0 %1473
        %v1475 = vsel %vm987, %v1470, 0.0
        %1476 = vadd.xlane.f32.xlu0 %v1475
        %v1477 = vpop.xlane.xlu0 %1476
        %v1478 = vrcp.pop 64.0
        %v1479 = vmul.f32 %v1474, %v1478
        %v1480 = vmul.f32 %v1477, %v1478
        %v1481 = vsub.f32 %v1469, %v1479
        %v1482 = vsub.f32 %v1470, %v1480
        %v1483 = vmul.f32 %v1481, %v1481
        %v1484 = vmul.f32 %v1482, %v1482
        %v1485 = vsel %vm987, %v1483, 0.0
        %1486 = vadd.xlane.f32.xlu0 %v1485
        %v1487 = vpop.xlane.xlu0 %1486
        %v1488 = vsel %vm987, %v1484, 0.0
        %1489 = vadd.xlane.f32.xlu0 %v1488
        %v1490 = vpop.xlane.xlu0 %1489
        %v1491 = vmul.f32 %v1487, %v1478
        %v1492 = vmul.f32 %v1490, %v1478
        %v1493 = vadd.f32 %v1491, 1e-05
        %v1494 = vadd.f32 %v1492, 1e-05
        %v1495 = vrsqrt.pop %v1493
        %v1496 = vrsqrt.pop %v1494
        %v1497 = vmul.f32 %v1481, %v1495
        %v1498 = vmul.f32 %v1482, %v1496
        %v1499 = vlaneseq
        %v1500 = vshrl.u32 %v1499, 7
        %v1501 = vsub.s32 0, %v1500
        %v1502 = vrot.slane %v1471, %v1501
        %v1503 = vmul.f32 %v1497, %v1502
        %v1504 = vmul.f32 %v1498, %v1502
        %v1505 = vlaneseq
        %v1506 = vshrl.u32 %v1505, 7
        %v1507 = vsub.s32 1, %v1506
        %v1508 = vrot.slane %v1471, %v1507
        %v1509 = vadd.f32 %v1503, %v1508
        %v1510 = vadd.f32 %v1504, %v1508
        %v1511 = vpack.c.bf16 %v1510, %v1509
        %v1512 = vld [vmem:[%s797] sm:$0xf]
        %v1513 = vld [vmem:[%s797 + $0x4] sm:$0xf]
        %v1514 = vld [vmem:[%s797 + $0x8] sm:$0xf]
        %v1515 = vld [vmem:[%s797 + $0xc] sm:$0xf]
        %v1516 = vld [vmem:[%s797 + $0x10] sm:$0xf]
        %v1517 = vld [vmem:[%s797 + $0x14] sm:$0xf]
        %v1518 = vld [vmem:[%s797 + $0x18] sm:$0xf]
        %v1519 = vld [vmem:[%s797 + $0x1c] sm:$0xf]
        %v1520 = vld [vmem:[%s924] sm:$0x1]
        %v1522 = vlaneseq
        %v1523 = vshrl.u32 %v1522, 7
        %v1524 = vsub.s32 0, %v1523
        %v1525 = vrot.slane %v1520, %v1524
        %v1535 = vunpack.c.l.b16 %v1512
        %v1536 = vunpack.c.l.b16 %v1513
        %v1537 = vunpack.c.l.b16 %v1514
        %v1538 = vunpack.c.l.b16 %v1515
        %v1539 = vunpack.c.l.b16 %v1516
        %v1540 = vunpack.c.l.b16 %v1517
        %v1541 = vunpack.c.l.b16 %v1518
        %v1542 = vunpack.c.l.b16 %v1519
        %v1543 = vpack.c.b16 %v1536, %v1535
        %v1544 = vpack.c.b16 %v1538, %v1537
        %v1545 = vpack.c.b16 %v1540, %v1539
        %v1546 = vpack.c.b16 %v1542, %v1541
        %v1552 = vsel %vm987, %v1511, 0
        %1554 = vmatprep.subr.bf16.mxu0 0
        %1555 = vmatpush1.bf16.msra.mxu0 0
        %1556 = vmatprep.subr.bf16.mxu0 0
        %1557 = vmatpush1.bf16.msra.mxu0 0
        %1558 = vmatprep.subr.bf16.mxu0 0
        %1559 = vmatpush1.bf16.msra.mxu0 0
        %1560 = vmatprep.subr.bf16.mxu0 0
        %1561 = vmatpush1.bf16.msra.mxu0 0
        %1562 = vmatprep.subr.bf16.mxu0 0
        %1563 = vmatpush1.bf16.msra.mxu0 %v1546
        %1564 = vmatprep.subr.bf16.mxu0 0
        %1565 = vmatpush1.bf16.msra.mxu0 %v1545
        %1566 = vmatprep.subr.bf16.mxu0 0
        %1567 = vmatpush1.bf16.msra.mxu0 %v1544
        %1568 = vmatprep.subr.bf16.mxu0 0
        %1569 = vmatpush1.bf16.msra.mxu0 %v1543
        %1570 = vmatprep.subr.bf16.mxu0 0
        %1571 = vmatpush2.bf16.msra.mxu0 0
        %1572 = vmatprep.subr.bf16.mxu0 0
        %1573 = vmatpush2.bf16.msra.mxu0 0
        %1574 = vmatprep.subr.bf16.mxu0 0
        %1575 = vmatpush2.bf16.msra.mxu0 0
        %1576 = vmatprep.subr.bf16.mxu0 0
        %1577 = vmatpush2.bf16.msra.mxu0 0
        %1578 = vmatprep.subr.bf16.mxu0 0
        %1579 = vmatpush2.bf16.msra.mxu0 0
        %1580 = vmatprep.subr.bf16.mxu0 0
        %1581 = vmatpush2.bf16.msra.mxu0 0
        %1582 = vmatprep.subr.bf16.mxu0 0
        %1583 = vmatpush2.bf16.msra.mxu0 0
        %1584 = vmatprep.subr.bf16.mxu0 0
        %1585 = vmatpush2.bf16.msra.mxu0 0
        %1586 = vmatprep.mubr.bf16.mxu0 0
        %1587 = vmatmul.mubr.bf16.gmra.mxu0 %v1552
        %v1588 = vpop.f32.mrf.mxu0
        %v1589 = vadd.f32 %v1525, %v1588
        %v1590 = vpop.f32.mrf.mxu0
        %v1591 = vpop.f32.mrf.mxu0
        %v1592 = vadd.f32 %v1525, %v1591
        %v1593 = vpop.f32.mrf.mxu0
        %1594 = vdwg.mxu0
        %v1595 = vmax.f32 %v1589, 0.0
        %v1596 = vmax.f32 %v1592, 0.0
        %v1597 = vpack.c.bf16 %v1596, %v1595
        %v1598 = vld [vmem:[%s806] sm:$0xf]
        %v1599 = vld [vmem:[%s806 + $0x4] sm:$0xf]
        %v1600 = vld [vmem:[%s806 + $0x8] sm:$0xf]
        %v1601 = vld [vmem:[%s806 + $0xc] sm:$0xf]
        %v1602 = vld [vmem:[%s806 + $0x10] sm:$0xf]
        %v1603 = vld [vmem:[%s806 + $0x14] sm:$0xf]
        %v1604 = vld [vmem:[%s806 + $0x18] sm:$0xf]
        %v1605 = vld [vmem:[%s806 + $0x1c] sm:$0xf]
        %v1606 = vld [vmem:[%s927] sm:$0x1]
        %v1608 = vlaneseq
        %v1609 = vshrl.u32 %v1608, 7
        %v1610 = vsub.s32 0, %v1609
        %v1611 = vrot.slane %v1606, %v1610
        %v1621 = vunpack.c.l.b16 %v1598
        %v1622 = vunpack.c.l.b16 %v1599
        %v1623 = vunpack.c.l.b16 %v1600
        %v1624 = vunpack.c.l.b16 %v1601
        %v1625 = vunpack.c.l.b16 %v1602
        %v1626 = vunpack.c.l.b16 %v1603
        %v1627 = vunpack.c.l.b16 %v1604
        %v1628 = vunpack.c.l.b16 %v1605
        %v1629 = vpack.c.b16 %v1622, %v1621
        %v1630 = vpack.c.b16 %v1624, %v1623
        %v1631 = vpack.c.b16 %v1626, %v1625
        %v1632 = vpack.c.b16 %v1628, %v1627
        %v1638 = vsel %vm987, %v1597, 0
        %1640 = vmatprep.subr.bf16.mxu0 0
        %1641 = vmatpush1.bf16.msra.mxu0 0
        %1642 = vmatprep.subr.bf16.mxu0 0
        %1643 = vmatpush1.bf16.msra.mxu0 0
        %1644 = vmatprep.subr.bf16.mxu0 0
        %1645 = vmatpush1.bf16.msra.mxu0 0
        %1646 = vmatprep.subr.bf16.mxu0 0
        %1647 = vmatpush1.bf16.msra.mxu0 0
        %1648 = vmatprep.subr.bf16.mxu0 0
        %1649 = vmatpush1.bf16.msra.mxu0 %v1632
        %1650 = vmatprep.subr.bf16.mxu0 0
        %1651 = vmatpush1.bf16.msra.mxu0 %v1631
        %1652 = vmatprep.subr.bf16.mxu0 0
        %1653 = vmatpush1.bf16.msra.mxu0 %v1630
        %1654 = vmatprep.subr.bf16.mxu0 0
        %1655 = vmatpush1.bf16.msra.mxu0 %v1629
        %1656 = vmatprep.subr.bf16.mxu0 0
        %1657 = vmatpush2.bf16.msra.mxu0 0
        %1658 = vmatprep.subr.bf16.mxu0 0
        %1659 = vmatpush2.bf16.msra.mxu0 0
        %1660 = vmatprep.subr.bf16.mxu0 0
        %1661 = vmatpush2.bf16.msra.mxu0 0
        %1662 = vmatprep.subr.bf16.mxu0 0
        %1663 = vmatpush2.bf16.msra.mxu0 0
        %1664 = vmatprep.subr.bf16.mxu0 0
        %1665 = vmatpush2.bf16.msra.mxu0 0
        %1666 = vmatprep.subr.bf16.mxu0 0
        %1667 = vmatpush2.bf16.msra.mxu0 0
        %1668 = vmatprep.subr.bf16.mxu0 0
        %1669 = vmatpush2.bf16.msra.mxu0 0
        %1670 = vmatprep.subr.bf16.mxu0 0
        %1671 = vmatpush2.bf16.msra.mxu0 0
        %1672 = vmatprep.mubr.bf16.mxu0 0
        %1673 = vmatmul.mubr.bf16.gmra.mxu0 %v1638
        %v1674 = vpop.f32.mrf.mxu0
        %v1675 = vadd.f32 %v1611, %v1674
        %v1676 = vpop.f32.mrf.mxu0
        %v1677 = vpop.f32.mrf.mxu0
        %v1678 = vadd.f32 %v1611, %v1677
        %v1679 = vpop.f32.mrf.mxu0
        %1680 = vdwg.mxu0
        %v1681 = vadd.f32 %v1509, %v1675
        %v1682 = vadd.f32 %v1510, %v1678
        %v1683 = vld [vmem:[%s931] sm:$0x3]
        %v1684 = vsel %vm987, %v1681, 0.0
        %1685 = vadd.xlane.f32.xlu0 %v1684
        %v1686 = vpop.xlane.xlu0 %1685
        %v1687 = vsel %vm987, %v1682, 0.0
        %1688 = vadd.xlane.f32.xlu0 %v1687
        %v1689 = vpop.xlane.xlu0 %1688
        %v1690 = vmul.f32 %v1686, %v1478
        %v1691 = vmul.f32 %v1689, %v1478
        %v1692 = vsub.f32 %v1681, %v1690
        %v1693 = vsub.f32 %v1682, %v1691
        %v1694 = vmul.f32 %v1692, %v1692
        %v1695 = vmul.f32 %v1693, %v1693
        %v1696 = vsel %vm987, %v1694, 0.0
        %1697 = vadd.xlane.f32.xlu0 %v1696
        %v1698 = vpop.xlane.xlu0 %1697
        %v1699 = vsel %vm987, %v1695, 0.0
        %1700 = vadd.xlane.f32.xlu0 %v1699
        %v1701 = vpop.xlane.xlu0 %1700
        %v1702 = vmul.f32 %v1698, %v1478
        %v1703 = vmul.f32 %v1701, %v1478
        %v1704 = vadd.f32 %v1702, 1e-05
        %v1705 = vadd.f32 %v1703, 1e-05
        %v1706 = vrsqrt.pop %v1704
        %v1707 = vrsqrt.pop %v1705
        %v1708 = vmul.f32 %v1692, %v1706
        %v1709 = vmul.f32 %v1693, %v1707
        %v1710 = vlaneseq
        %v1711 = vshrl.u32 %v1710, 7
        %v1712 = vsub.s32 0, %v1711
        %v1713 = vrot.slane %v1683, %v1712
        %v1714 = vmul.f32 %v1708, %v1713
        %v1715 = vmul.f32 %v1709, %v1713
        %v1716 = vlaneseq
        %v1717 = vshrl.u32 %v1716, 7
        %v1718 = vsub.s32 1, %v1717
        %v1719 = vrot.slane %v1683, %v1718
        %v1720 = vadd.f32 %v1714, %v1719
        %v1721 = vadd.f32 %v1715, %v1719
        %1722 = vst.msk [vmem:[#allocation2] sm:$0xff] %vm987, %v1720
        %1723 = vst.msk [vmem:[#allocation2 + $0x8] sm:$0xff] %vm987, %v1721
        %p1724 = scmp.eq.s32.totalorder %s53, 1
        // Predicated region
        $region125: #{tpu_custom_call.1} parent=87 // pred_check
          %p1725 = pneg %p1724
        $region126: #{tpu_custom_call.1} parent=87 // pred_check_branch
          %1727 = sbr.rel (%p1725) target = $region128
        $region127: #{tpu_custom_call.1} parent=87 // pred_region
          %v1728 = vld [vmem:[%s15] sm:$0x1]
          %v1729 = vld [vmem:[#allocation3] sm:$0x1]
          %1731 = vset.pattern.permute.xlu0 0
          %1732 = vperm.xlu0 %1731, %v1729
          %v1733 = vpop.permute.xlu0 %1732
          %v1735 = vlaneseq
          %v1736 = vshrl.u32 %v1735, 7
          %v1737 = vsub.s32 0, %v1736
          %v1738 = vrot.slane %v1733, %v1737
          %v1740 = vsel %vm987, %v1728, 0
          %v1743 = vsel %vm987, %v1720, 0
          %v1746 = vsel %vm987, %v1721, 0
          %1748 = vmatprep.subr.mxu0 0.0
          %1749 = vmatpush1.xpose.msra.mxu0 0.0
          %1750 = vmatprep.subr.mxu0 0.0
          %1751 = vmatpush1.xpose.msra.mxu0 0.0
          %1752 = vmatprep.subr.mxu0 0.0
          %1753 = vmatpush1.xpose.msra.mxu0 0.0
          %1754 = vmatprep.subr.mxu0 0.0
          %1755 = vmatpush1.xpose.msra.mxu0 0.0
          %1756 = vmatprep.subr.mxu0 0.0
          %1757 = vmatpush1.xpose.msra.mxu0 0.0
          %1758 = vmatprep.subr.mxu0 0.0
          %1759 = vmatpush1.xpose.msra.mxu0 0.0
          %1760 = vmatprep.subr.mxu0 0.0
          %1761 = vmatpush1.xpose.msra.mxu0 0.0
          %1762 = vmatprep.subr.mxu0 0.0
          %1763 = vmatpush1.xpose.msra.mxu0 0.0
          %1764 = vmatprep.subr.mxu0 0.0
          %1765 = vmatpush1.xpose.msra.mxu0 0.0
          %1766 = vmatprep.subr.mxu0 0.0
          %1767 = vmatpush1.xpose.msra.mxu0 0.0
          %1768 = vmatprep.subr.mxu0 0.0
          %1769 = vmatpush1.xpose.msra.mxu0 0.0
          %1770 = vmatprep.subr.mxu0 0.0
          %1771 = vmatpush1.xpose.msra.mxu0 0.0
          %1772 = vmatprep.subr.mxu0 0.0
          %1773 = vmatpush1.xpose.msra.mxu0 0.0
          %1774 = vmatprep.subr.mxu0 0.0
          %1775 = vmatpush1.xpose.msra.mxu0 0.0
          %1776 = vmatprep.subr.mxu0 0.0
          %1777 = vmatpush1.xpose.msra.mxu0 %v1746
          %1778 = vmatprep.subr.mxu0 0.0
          %1779 = vmatpush1.xpose.msra.mxu0 %v1743
          %1780 = vmatprep.subr.mxu0 0.0
          %1781 = vmatpush2.xpose.msra.mxu0 0.0
          %1782 = vmatprep.subr.mxu0 0.0
          %1783 = vmatpush2.xpose.msra.mxu0 0.0
          %1784 = vmatprep.subr.mxu0 0.0
          %1785 = vmatpush2.xpose.msra.mxu0 0.0
          %1786 = vmatprep.subr.mxu0 0.0
          %1787 = vmatpush2.xpose.msra.mxu0 0.0
          %1788 = vmatprep.subr.mxu0 0.0
          %1789 = vmatpush2.xpose.msra.mxu0 0.0
          %1790 = vmatprep.subr.mxu0 0.0
          %1791 = vmatpush2.xpose.msra.mxu0 0.0
          %1792 = vmatprep.subr.mxu0 0.0
          %1793 = vmatpush2.xpose.msra.mxu0 0.0
          %1794 = vmatprep.subr.mxu0 0.0
          %1795 = vmatpush2.xpose.msra.mxu0 0.0
          %1796 = vmatprep.subr.mxu0 0.0
          %1797 = vmatpush2.xpose.msra.mxu0 0.0
          %1798 = vmatprep.subr.mxu0 0.0
          %1799 = vmatpush2.xpose.msra.mxu0 0.0
          %1800 = vmatprep.subr.mxu0 0.0
          %1801 = vmatpush2.xpose.msra.mxu0 0.0
          %1802 = vmatprep.subr.mxu0 0.0
          %1803 = vmatpush2.xpose.msra.mxu0 0.0
          %1804 = vmatprep.subr.mxu0 0.0
          %1805 = vmatpush2.xpose.msra.mxu0 0.0
          %1806 = vmatprep.subr.mxu0 0.0
          %1807 = vmatpush2.xpose.msra.mxu0 0.0
          %1808 = vmatprep.subr.mxu0 0.0
          %1809 = vmatpush2.xpose.msra.mxu0 0.0
          %1810 = vmatprep.subr.mxu0 0.0
          %1811 = vmatpush2.xpose.msra.mxu0 0.0
          %1812 = vmatprep.mubr.f32.mxu0 0.0
          %1813 = vmatmul.mubr.f32.gmra.mxu0 %v1740
          %v1814 = vpop.f32.mrf.mxu0
          %v1815 = vadd.f32 %v1738, %v1814
          %v1816 = vpop.f32.mrf.mxu0
          %1817 = vdwg.mxu0
          %v1818 = vsub.f32 0.0, %v1815
          %v1819 = vmul.f32 %v1818, 1.442695
          %v1820 = vpow.pop %v1819
          %v1821 = vadd.f32 %v1820, 1.0
          %v1822 = vrcp.pop %v1821
          %v1823 = vmul.f32 1.0, %v1822
          %vm1824 = vcmask 122880
          %1825 = vst.msk [vmem:[%s908] sm:$0x1] %vm1824, %v1823
        $region128: #{tpu_custom_call.1} parent=87 // pred_fallthru
          _
        %s1826 = sand.u32 %s495, 1
        %s1827 = scalar_lea.sflag [#allocation6], %s1826
        %s1828 = sand.u32 %s495, 1
        %s1829 = scalar_lea.vmem [#allocation18], %s1828
        // Predicated region
        $region129: #{tpu_custom_call.1} parent=87 // pred_check
          %p1830 = pneg %p505
        $region130: #{tpu_custom_call.1} parent=87 // pred_check_branch
          %1832 = sbr.rel (%p1830) target = $region132
        $region131: #{tpu_custom_call.1} parent=87 // pred_region
          %s1834 = ssub.s32 16, 16
          %1835 = vsyncadd %s1827, %s1834
          %s1836 = smul.addr %s52, 16
          %s1837 = scalar_lea.hbm %s17, %s1836
          %s1839 = sshll.u32 %s1829, 4
          %s1840 = int_to_ptr.vmem [resolvable:$true] %s1839
          %1842 = dma.vmem_to_hbm [thread:$0]  %s1840, 16, %s1837, %s1827
        $region132: #{tpu_custom_call.1} parent=87 // pred_fallthru
          _
      $region88: #{tpu_custom_call.1} parent=5 // pred_fallthru
        _
      %p1843 = scmp.le.s32.totalorder 2, %s43
      // Predicated region
      $region133: #{tpu_custom_call.1} parent=5 // pred_check
        %p1844 = pneg %p1843
      $region134: #{tpu_custom_call.1} parent=5 // pred_check_branch
        %1846 = sbr.rel (%p1844) target = $region136
      $region135: #{tpu_custom_call.1} parent=5 // pred_region
        %s1847 = ssub.s32 %s43, 2
        // Predicated region
        $region137: #{tpu_custom_call.1} parent=135 // pred_check
          %p1848 = pneg %p511
        $region138: #{tpu_custom_call.1} parent=135 // pred_check_branch
          %1850 = sbr.rel (%p1848) target = $region140
        $region139: #{tpu_custom_call.1} parent=135 // pred_region
          %s1851 = sand.u32 %s496, 1
          %s1852 = scalar_lea.sflag [#allocation6], %s1851
          %s1853 = sand.u32 %s496, 1
          %s1854 = scalar_lea.vmem [#allocation18], %s1853
          %1855 = dma.done %s1852, 16
        $region140: #{tpu_custom_call.1} parent=135 // pred_fallthru
          _
      $region136: #{tpu_custom_call.1} parent=5 // pred_fallthru
        _
    $region6: #{tpu_custom_call.1} parent=1 // loop_footer
      %s47 = sadd.s32 1, %s43
    $region7: #{tpu_custom_call.1} parent=1 // loop_footer_branch
      %42 = sbr.rel target = $region3
    $region8: #{tpu_custom_call.1} parent=1 // loop_exit
      _
    %1856 = vsyncpa [#allocation5], 1
    %s1857 = scalar_lea.sflag [#allocation5], 1
    %1858 = vsyncpa %s1857, 1
    %1859 = vsyncpa [#allocation8], 1
    %s1860 = scalar_lea.sflag [#allocation8], 1
    %1861 = vsyncpa %s1860, 1
    %1862 = vsyncpa [#allocation11], 1
    %s1863 = scalar_lea.sflag [#allocation11], 1
    %1864 = vsyncpa %s1863, 1
    %1865 = vsyncpa [#allocation14], 1
    %s1866 = scalar_lea.sflag [#allocation14], 1
    %1867 = vsyncpa %s1866, 1
    %1868 = vsyncpa [#allocation17], 1
    %s1869 = scalar_lea.sflag [#allocation17], 1
    %1870 = vsyncpa %s1869, 1
    %1871 = vsyncpa [#allocation6], 1
    %s1872 = scalar_lea.sflag [#allocation6], 1
    %1873 = vsyncpa %s1872, 1

</llo_original>
